<compile_context>
chip_gen: v7x
topology: tpu7x:2x2x1
jax: 0.10.0
libtpu: 0.0.40
codegen_flags: <defaults>
</compile_context>

<pallas_src>
import functools

import jax
import jax.numpy as jnp
from jax.experimental import pallas as pl
from jax.experimental.pallas import tpu as pltpu


def _round_up(x, m):
    return ((x + m - 1) // m) * m


def _silu(v):
    return v * jax.nn.sigmoid(v)


# ---------------------------------------------------------------------------
# Kernel A: per-edge MLPs -> lane-dense bf16 payload  [m_ij | weighted_rel | 0]
# Grid: (edge tiles,)  -- runs exactly once per edge tile.
# ---------------------------------------------------------------------------
def _edge_payload_kernel(update_coors,
                         edge_in_ref, rel_ref,
                         w1_ref, b1_ref, w2_ref, b2_ref,
                         wc1_ref, bc1_ref, wc2r_ref, bc2_ref,
                         out_ref):
    f32 = jnp.float32
    te = edge_in_ref.shape[0]
    pos_dim = rel_ref.shape[1]

    # edge MLP: m_ij = SiLU(Lin2(SiLU(Lin1(edge_in))))  -- small f32 matmuls.
    h1 = _silu(jnp.dot(edge_in_ref[...], w1_ref[...],
                       preferred_element_type=f32) + b1_ref[...])
    m_ij = _silu(jnp.dot(h1, w2_ref[...],
                         preferred_element_type=f32) + b2_ref[...])          # (te, m)

    if update_coors:
        c1 = _silu(jnp.dot(m_ij, wc1_ref[...],
                           preferred_element_type=f32) + bc1_ref[...])        # (te, 4m)
        # 1-output-column matmul done as a VPU row reduction.
        coor_w = jnp.sum(c1 * wc2r_ref[...], axis=-1, keepdims=True) + bc2_ref[...]
        weighted_rel = coor_w * rel_ref[...]                                   # (te, pos)
    else:
        weighted_rel = jnp.zeros((te, pos_dim), f32)

    # Lane-dense payload: [m_ij | weighted_rel | zero pad] -> bf16 for the
    # downstream one-hot scatter MXU pass.  Padded edges produce nonzero rows
    # (bias-driven) but their dst == -1 never matches a node id, so they are
    # cancelled by the zero one-hot column (sum aggregation only).
    pad_w = out_ref.shape[1] - m_ij.shape[1] - weighted_rel.shape[1]
    parts = [m_ij, weighted_rel]
    if pad_w > 0:
        parts.append(jnp.zeros((te, pad_w), f32))
    out_ref[...] = jnp.concatenate(parts, axis=-1).astype(out_ref.dtype)


# ---------------------------------------------------------------------------
# Kernel B: one-hot scatter-add of the payload + node MLP finalize.
# Grid: (node tiles "parallel", edge tiles "arbitrary") with scalar-prefetch
# bucketing so each node tile only visits edge tiles holding its destinations.
# ---------------------------------------------------------------------------
def _scatter_node_kernel(update_coors, update_feats, residual, m_dim, pos_dim,
                         lo_ref, nblk_ref,
                         dst_ref, payload_ref, feats_ref, coors_ref,
                         wn1f_ref, wn1m_ref, bn1_ref, wn2_ref, bn2_ref,
                         out_ref, acc_ref):
    f32 = jnp.float32
    bf16 = jnp.bfloat16
    n_idx = pl.program_id(0)
    e_idx = pl.program_id(1)
    tn = out_ref.shape[0]
    te = dst_ref.shape[1]

    @pl.when(e_idx == 0)
    def _():
        acc_ref[...] = jnp.zeros_like(acc_ref)

    # Only edge tiles inside this node tile's bucket do real scatter work.
    @pl.when(e_idx < nblk_ref[n_idx])
    def _():
        row_ids = jax.lax.broadcasted_iota(jnp.int32, (tn, te), 0)
        local_dst = dst_ref[...] - n_idx * tn           # shift the (1, te) row
        eq = row_ids == local_dst                        # (tn, te)
        scat = jnp.where(eq, jnp.bfloat16(1.0), jnp.bfloat16(0.0))
        acc_ref[...] += jnp.dot(scat, payload_ref[...],
                                preferred_element_type=f32)   # (tn, 128) f32

    @pl.when(e_idx == pl.num_programs(1) - 1)
    def _():
        acc = acc_ref[...]
        feats = feats_ref[...]
        coors = coors_ref[...]
        coors_out = (coors + acc[:, m_dim:m_dim + pos_dim]) if update_coors else coors
        if update_feats:
            m_i = acc[:, :m_dim]                                              # (tn, m)
            # node_mlp input is cat([feats, m_i]); concat avoided via split W.
            n1 = _silu(jnp.dot(feats, wn1f_ref[...], preferred_element_type=f32)
                       + jnp.dot(m_i, wn1m_ref[...], preferred_element_type=f32)
                       + bn1_ref[...])
            h_out = jnp.dot(n1, wn2_ref[...], preferred_element_type=f32) + bn2_ref[...]
            if residual:
                h_out = h_out + feats
        else:
            h_out = feats
        # Single lane-dense packed output slab: [coors | h | zero-pad].
        pad_w = out_ref.shape[1] - pos_dim - h_out.shape[1]
        parts = [coors_out, h_out]
        if pad_w > 0:
            parts.append(jnp.zeros((tn, pad_w), f32))
        out_ref[...] = jnp.concatenate(parts, axis=-1)


def egnn_layer_apply(params, feats, coors, edge_index, edge_attr,
                     update_coors=True, update_feats=True, norm_coors=False):
    """One EGNN_Sparse layer: gathers/sort in JAX, MLPs + fused scatter in Pallas."""
    f32 = jnp.float32
    feats = feats.astype(f32)
    coors = coors.astype(f32)
    src = edge_index[0].astype(jnp.int32)                 # PyG flow: source_to_target
    dst = edge_index[1].astype(jnp.int32)

    # ---- bucket edges by destination node (enables scalar-prefetch skip) ----
    order = jnp.argsort(dst)
    src_s, dst_s = src[order], dst[order]
    edge_attr_s = edge_attr.astype(f32)[order]

    # TODO(synk): the feats[src]/feats[dst] gathers + edge_in concat stay in XLA;
    # folding them into kernel A would need an in-kernel dynamic gather.
    x_i = feats[dst_s]
    x_j = feats[src_s]
    rel_coors = coors[src_s] - coors[dst_s]
    rel_dist = jnp.sum(rel_coors ** 2, axis=-1, keepdims=True)
    edge_in = jnp.concatenate([x_i, x_j, edge_attr_s, rel_dist], axis=-1)

    if norm_coors:
        # CoorsNorm: rel / clamp(|rel|, eps) * scale (scale_init = 1e-2)
        nrm = jnp.sqrt(jnp.sum(rel_coors ** 2, axis=-1, keepdims=True))
        rel_coors = rel_coors / jnp.maximum(nrm, 1e-8) * params["coors_scale"]

    n_nodes, pos_dim = coors.shape
    n_edges = edge_in.shape[0]
    feats_dim = feats.shape[1]
    m_dim = params["w2"].shape[1]
    out_dim = params["wn2"].shape[1] if update_feats else feats_dim
    # TODO(synk): reference EGNN_Sparse adds the feats residual unconditionally;
    # it only type-checks when out_dim == feats_dim, so it is gated on that here.
    residual = bool(update_feats and (out_dim == feats_dim))
    hid_dim = out_dim if update_feats else feats_dim

    # ---- tiling / padding ----------------------------------------------------
    # Node tiles -> "parallel" grid axis; ensure >=2 node tiles when n >= 16 so
    # v7x's second TensorCore is used.  Edge tiles -> "arbitrary" reduction axis.
    if n_nodes >= 16:
        tn = min(512, _round_up(-(-n_nodes // 2), 8))
    else:
        tn = 8
    te = min(2048, _round_up(n_edges, 128))
    n_pad = _round_up(n_nodes, tn)
    e_pad = _round_up(n_edges, te)
    num_n_blocks = n_pad // tn
    num_e_blocks = e_pad // te
    din = edge_in.shape[1]
    din_pad = _round_up(din, 8)                   # sublane-align the contraction dim
    pay_w = _round_up(m_dim + pos_dim, 128)       # lane-dense payload / accumulator
    out_w = _round_up(pos_dim + hid_dim, 128)     # lane-dense packed output

    edge_in_p = jnp.pad(edge_in, ((0, e_pad - n_edges), (0, din_pad - din)))
    rel_p = jnp.pad(rel_coors, ((0, e_pad - n_edges), (0, 0)))
    dst_p = jnp.pad(dst_s, (0, e_pad - n_edges), constant_values=-1).reshape(1, e_pad)
    feats_p = jnp.pad(feats, ((0, n_pad - n_nodes), (0, 0)))
    coors_p = jnp.pad(coors, ((0, n_pad - n_nodes), (0, 0)))
    w1_p = jnp.pad(params["w1"], ((0, din_pad - din), (0, 0)))
    wc2r = params["wc2"].T                        # (1, 4m) row for the VPU reduction

    # Per-node-tile edge-block ranges from the sorted dst vector.
    boundaries = jnp.arange(num_n_blocks + 1, dtype=jnp.int32) * tn
    cuts = jnp.searchsorted(dst_s, boundaries, side="left").astype(jnp.int32)
    start_e, end_e = cuts[:-1], cuts[1:]
    lo0 = start_e // te
    hi = (end_e + te - 1) // te
    n_blk = jnp.maximum(hi - lo0, 0).astype(jnp.int32)
    lo_blk = jnp.minimum(lo0, num_e_blocks - 1).astype(jnp.int32)

    # ---- kernel A: per-edge payload (runs once per edge tile) -----------------
    edge_weight_args = (w1_p, params["b1"], params["w2"], params["b2"],
                        params["wc1"], params["bc1"], wc2r, params["bc2"])
    edge_kernel = functools.partial(_edge_payload_kernel, update_coors)
    payload = pl.pallas_call(
        edge_kernel,
        out_shape=jax.ShapeDtypeStruct((e_pad, pay_w), jnp.bfloat16),
        grid_spec=pltpu.PrefetchScalarGridSpec(
            num_scalar_prefetch=0,
            grid=(num_e_blocks,),
            in_specs=[pl.BlockSpec((te, din_pad), lambda e: (e, 0)),
                      pl.BlockSpec((te, pos_dim), lambda e: (e, 0))]
                     + [pl.BlockSpec(w.shape, lambda e: (0, 0))
                        for w in edge_weight_args],
            out_specs=pl.BlockSpec((te, pay_w), lambda e: (e, 0)),
        ),
        compiler_params=pltpu.CompilerParams(
            dimension_semantics=("parallel",),
            vmem_limit_bytes=32 * 1024 * 1024,
        ),
    )(edge_in_p, rel_p, *edge_weight_args)

    # ---- kernel B: bucketed one-hot scatter + node MLP -------------------------
    node_weight_args = (params["wn1f"], params["wn1m"], params["bn1"],
                        params["wn2"], params["bn2"])

    def _e_blk(n, e, lo, nb):
        # Clamp so skipped (empty) iterations keep a valid, unchanged block index
        # (Pallas then skips the re-DMA for repeated indices).
        return jnp.minimum(lo[n] + e, num_e_blocks - 1)

    node_kernel = functools.partial(_scatter_node_kernel, update_coors, update_feats,
                                    residual, m_dim, pos_dim)
    packed = pl.pallas_call(
        node_kernel,
        out_shape=jax.ShapeDtypeStruct((n_pad, out_w), f32),
        grid_spec=pltpu.PrefetchScalarGridSpec(
            num_scalar_prefetch=2,
            grid=(num_n_blocks, num_e_blocks),
            in_specs=[
                pl.BlockSpec((1, te),
                             lambda n, e, lo, nb: (0, _e_blk(n, e, lo, nb))),
                pl.BlockSpec((te, pay_w),
                             lambda n, e, lo, nb: (_e_blk(n, e, lo, nb), 0)),
                pl.BlockSpec((tn, feats_dim), lambda n, e, lo, nb: (n, 0)),
                pl.BlockSpec((tn, pos_dim), lambda n, e, lo, nb: (n, 0)),
            ] + [pl.BlockSpec(w.shape, lambda n, e, lo, nb: (0, 0))
                 for w in node_weight_args],
            out_specs=pl.BlockSpec((tn, out_w), lambda n, e, lo, nb: (n, 0)),
            scratch_shapes=[pltpu.VMEM((tn, pay_w), f32)],
        ),
        compiler_params=pltpu.CompilerParams(
            dimension_semantics=("parallel", "arbitrary"),
            vmem_limit_bytes=32 * 1024 * 1024,
        ),
    )(lo_blk, n_blk, dst_p, payload, feats_p, coors_p, *node_weight_args)

    coors_out = packed[:n_nodes, :pos_dim]
    feats_out = packed[:n_nodes, pos_dim:pos_dim + hid_dim]
    return feats_out, coors_out


def _linear_init(key, fan_in, fan_out):
    """torch.nn.Linear-style uniform init, weight stored (in, out)."""
    k = 1.0 / jnp.sqrt(jnp.float32(fan_in))
    kw, kb = jax.random.split(key)
    w = jax.random.uniform(kw, (fan_in, fan_out), jnp.float32, -k, k)
    b = jax.random.uniform(kb, (1, fan_out), jnp.float32, -k, k)
    return w, b


def init_egnn_layer(key, feats_dim, pos_dim, edge_attr_dim, m_dim, out_dim):
    edge_in_dim = edge_attr_dim + 1 + 2 * feats_dim
    ks = jax.random.split(key, 6)
    w1, b1 = _linear_init(ks[0], edge_in_dim, 2 * edge_in_dim)
    w2, b2 = _linear_init(ks[1], 2 * edge_in_dim, m_dim)
    wc1, bc1 = _linear_init(ks[2], m_dim, 4 * m_dim)
    wc2, bc2 = _linear_init(ks[3], 4 * m_dim, 1)
    wn1, bn1 = _linear_init(ks[4], feats_dim + m_dim, 2 * feats_dim)
    wn2, bn2 = _linear_init(ks[5], 2 * feats_dim, out_dim)
    return dict(w1=w1, b1=b1, w2=w2, b2=b2,
                wc1=wc1, bc1=bc1, wc2=wc2, bc2=bc2,
                wn1f=wn1[:feats_dim], wn1m=wn1[feats_dim:], bn1=bn1,
                wn2=wn2, bn2=bn2,
                coors_scale=jnp.float32(1e-2))


def gcn_grad_forward(layer_params, x, edge_index, edge_attr, batch, positions,
                     update_coors=True, update_feats=True, norm_coors=False):
    # xt = cat([positions, x], -1) -> track (coors, feats) separately.
    feats = x.astype(jnp.float32)
    coors = positions.astype(jnp.float32)
    # TODO(synk): fusing the whole layer stack into one pallas_call (stacked,
    # padded per-layer weights indexed by a layer grid axis) would remove the
    # per-layer launch + HBM round trip of the tiny feats/coors tensors; kept
    # per-layer here because layer shapes differ (feats 2 -> 8 -> 8).
    for p in layer_params:
        feats, coors = egnn_layer_apply(
            p, feats, coors, edge_index, edge_attr,
            update_coors=update_coors, update_feats=update_feats,
            norm_coors=norm_coors)

    # return xt[:, :2]  == updated coordinate block (self.lin is unused in forward).
    return coors[:, :2]


if __name__ == "__main__":
    key = jax.random.PRNGKey(0)

    # Small synthetic graph consistent with the module: pos_dim=2, feats_dim=2, edge_attr_dim=1.
    N, E = 8, 16
    pos_dim, feats_dim, edge_attr_dim = 2, 2, 1
    m_dims = [16, 16]
    output_dims = [8, 8]           # update_feats=True -> feats: 2 -> 8 -> 8
    update_coors, update_feats = True, True
    norm_coors = False
    # dropout = 0.0 -> identity (inference)

    k_x, k_pos, k_ei, k_ea, k_par = jax.random.split(key, 5)
    x = jax.random.normal(k_x, (N, feats_dim), jnp.float32)
    positions = jax.random.normal(k_pos, (N, pos_dim), jnp.float32)
    edge_index = jax.random.randint(k_ei, (2, E), 0, N)
    edge_attr = jax.random.normal(k_ea, (E, edge_attr_dim), jnp.float32)
    batch = jnp.zeros((N,), jnp.int32)   # unused (norm_feats=False in EGNN_Sparse)

    layer_params = []
    in_feats = feats_dim
    pks = jax.random.split(k_par, len(m_dims))
    for i, (m_dim, out_dim) in enumerate(zip(m_dims, output_dims)):
        layer_params.append(
            init_egnn_layer(pks[i], in_feats, pos_dim, edge_attr_dim, m_dim, out_dim))
        if update_feats:
            in_feats = out_dim

    out = gcn_grad_forward(layer_params, x, edge_index, edge_attr, batch, positions,
                           update_coors=update_coors, update_feats=update_feats,
                           norm_coors=norm_coors)
    jax.block_until_ready(out)
    assert out.shape == (N, 2) and out.dtype == jnp.float32
    print("KERNEL_OK")
</pallas_src>

<mosaic_0001>
module attributes {stable_mosaic.version = 11 : i64} {
  func.func @_edge_payload_kernel(%arg0: i32, %arg1: memref<128x8xf32, #tpu.memory_space<vmem>>, %arg2: memref<128x2xf32, #tpu.memory_space<vmem>>, %arg3: memref<8x12xf32, #tpu.memory_space<vmem>>, %arg4: memref<1x12xf32, #tpu.memory_space<vmem>>, %arg5: memref<12x16xf32, #tpu.memory_space<vmem>>, %arg6: memref<1x16xf32, #tpu.memory_space<vmem>>, %arg7: memref<16x64xf32, #tpu.memory_space<vmem>>, %arg8: memref<1x64xf32, #tpu.memory_space<vmem>>, %arg9: memref<1x64xf32, #tpu.memory_space<vmem>>, %arg10: memref<1x1xf32, #tpu.memory_space<vmem>>, %arg11: memref<128x128xbf16, #tpu.memory_space<vmem>>) attributes {dimension_semantics = [#tpu.dimension_semantics<parallel>], iteration_bounds = array<i64: 1>, scalar_prefetch = 0 : i64, scratch_operands = 0 : i64, tpu.core_type = #tpu.core_type<tc>, window_params = [{transform_indices = @transform_0, window_bounds = array<i64: 128, 8>}, {transform_indices = @transform_1, window_bounds = array<i64: 128, 2>}, {pipeline_mode = #tpu.pipeline_mode<synchronous>, transform_indices = @transform_2, window_bounds = array<i64: 8, 12>}, {pipeline_mode = #tpu.pipeline_mode<synchronous>, transform_indices = @transform_3, window_bounds = array<i64: 1, 12>}, {pipeline_mode = #tpu.pipeline_mode<synchronous>, transform_indices = @transform_4, window_bounds = array<i64: 12, 16>}, {pipeline_mode = #tpu.pipeline_mode<synchronous>, transform_indices = @transform_5, window_bounds = array<i64: 1, 16>}, {pipeline_mode = #tpu.pipeline_mode<synchronous>, transform_indices = @transform_6, window_bounds = array<i64: 16, 64>}, {pipeline_mode = #tpu.pipeline_mode<synchronous>, transform_indices = @transform_7, window_bounds = array<i64: 1, 64>}, {pipeline_mode = #tpu.pipeline_mode<synchronous>, transform_indices = @transform_8, window_bounds = array<i64: 1, 64>}, {pipeline_mode = #tpu.pipeline_mode<synchronous>, transform_indices = @transform_9, window_bounds = array<i64: 1, 1>}, {transform_indices = @transform_10, window_bounds = array<i64: 128, 128>}]} {
    %c0 = arith.constant 0 : index
    %c0_0 = arith.constant 0 : index
    %0 = vector.load %arg1[%c0, %c0_0] : memref<128x8xf32, #tpu.memory_space<vmem>>, vector<128x8xf32>
    %c0_1 = arith.constant 0 : index
    %c0_2 = arith.constant 0 : index
    %1 = vector.load %arg3[%c0_1, %c0_2] : memref<8x12xf32, #tpu.memory_space<vmem>>, vector<8x12xf32>
    %cst = arith.constant dense<0.000000e+00> : vector<128x12xf32>
    %2 = tpu.matmul %0, %1, %cst {dimension_numbers = #tpu.dot_dimension_numbers<[1], [0], [0], [1], [0, 0, 1, 1], [], []>} : vector<128x8xf32>, vector<8x12xf32>, vector<128x12xf32> -> vector<128x12xf32>
    %c0_3 = arith.constant 0 : index
    %c0_4 = arith.constant 0 : index
    %3 = vector.load %arg4[%c0_3, %c0_4] : memref<1x12xf32, #tpu.memory_space<vmem>>, vector<1x12xf32>
    %4 = vector.broadcast %3 : vector<1x12xf32> to vector<128x12xf32>
    %5 = arith.addf %2, %4 : vector<128x12xf32>
    %6 = arith.negf %5 : vector<128x12xf32>
    %7 = math.exp %6 : vector<128x12xf32>
    %cst_5 = arith.constant 1.000000e+00 : f32
    %8 = vector.broadcast %cst_5 : f32 to vector<128x12xf32>
    %9 = arith.addf %8, %7 : vector<128x12xf32>
    %10 = arith.divf %8, %9 : vector<128x12xf32>
    %11 = arith.mulf %5, %10 : vector<128x12xf32>
    %c0_6 = arith.constant 0 : index
    %c0_7 = arith.constant 0 : index
    %12 = vector.load %arg5[%c0_6, %c0_7] : memref<12x16xf32, #tpu.memory_space<vmem>>, vector<12x16xf32>
    %cst_8 = arith.constant dense<0.000000e+00> : vector<128x16xf32>
    %13 = tpu.matmul %11, %12, %cst_8 {dimension_numbers = #tpu.dot_dimension_numbers<[1], [0], [0], [1], [0, 0, 1, 1], [], []>} : vector<128x12xf32>, vector<12x16xf32>, vector<128x16xf32> -> vector<128x16xf32>
    %c0_9 = arith.constant 0 : index
    %c0_10 = arith.constant 0 : index
    %14 = vector.load %arg6[%c0_9, %c0_10] : memref<1x16xf32, #tpu.memory_space<vmem>>, vector<1x16xf32>
    %15 = vector.broadcast %14 : vector<1x16xf32> to vector<128x16xf32>
    %16 = arith.addf %13, %15 : vector<128x16xf32>
    %17 = arith.negf %16 : vector<128x16xf32>
    %18 = math.exp %17 : vector<128x16xf32>
    %cst_11 = arith.constant 1.000000e+00 : f32
    %19 = vector.broadcast %cst_11 : f32 to vector<128x16xf32>
    %20 = arith.addf %19, %18 : vector<128x16xf32>
    %21 = arith.divf %19, %20 : vector<128x16xf32>
    %22 = arith.mulf %16, %21 : vector<128x16xf32>
    %c0_12 = arith.constant 0 : index
    %c0_13 = arith.constant 0 : index
    %23 = vector.load %arg7[%c0_12, %c0_13] : memref<16x64xf32, #tpu.memory_space<vmem>>, vector<16x64xf32>
    %cst_14 = arith.constant dense<0.000000e+00> : vector<128x64xf32>
    %24 = tpu.matmul %22, %23, %cst_14 {dimension_numbers = #tpu.dot_dimension_numbers<[1], [0], [0], [1], [0, 0, 1, 1], [], []>} : vector<128x16xf32>, vector<16x64xf32>, vector<128x64xf32> -> vector<128x64xf32>
    %c0_15 = arith.constant 0 : index
    %c0_16 = arith.constant 0 : index
    %25 = vector.load %arg8[%c0_15, %c0_16] : memref<1x64xf32, #tpu.memory_space<vmem>>, vector<1x64xf32>
    %26 = vector.broadcast %25 : vector<1x64xf32> to vector<128x64xf32>
    %27 = arith.addf %24, %26 : vector<128x64xf32>
    %28 = arith.negf %27 : vector<128x64xf32>
    %29 = math.exp %28 : vector<128x64xf32>
    %cst_17 = arith.constant 1.000000e+00 : f32
    %30 = vector.broadcast %cst_17 : f32 to vector<128x64xf32>
    %31 = arith.addf %30, %29 : vector<128x64xf32>
    %32 = arith.divf %30, %31 : vector<128x64xf32>
    %33 = arith.mulf %27, %32 : vector<128x64xf32>
    %c0_18 = arith.constant 0 : index
    %c0_19 = arith.constant 0 : index
    %34 = vector.load %arg9[%c0_18, %c0_19] : memref<1x64xf32, #tpu.memory_space<vmem>>, vector<1x64xf32>
    %35 = vector.broadcast %34 : vector<1x64xf32> to vector<128x64xf32>
    %36 = arith.mulf %33, %35 : vector<128x64xf32>
    %cst_20 = arith.constant dense<0.000000e+00> : vector<128xf32>
    %37 = vector.multi_reduction <add>, %36, %cst_20 [1] : vector<128x64xf32> to vector<128xf32>
    %38 = vector.shape_cast %37 : vector<128xf32> to vector<128x1xf32>
    %c0_21 = arith.constant 0 : index
    %c0_22 = arith.constant 0 : index
    %39 = vector.load %arg10[%c0_21, %c0_22] : memref<1x1xf32, #tpu.memory_space<vmem>>, vector<1x1xf32>
    %40 = vector.broadcast %39 : vector<1x1xf32> to vector<128x1xf32>
    %41 = arith.addf %38, %40 : vector<128x1xf32>
    %c0_23 = arith.constant 0 : index
    %c0_24 = arith.constant 0 : index
    %42 = vector.load %arg2[%c0_23, %c0_24] : memref<128x2xf32, #tpu.memory_space<vmem>>, vector<128x2xf32>
    %43 = vector.broadcast %41 : vector<128x1xf32> to vector<128x2xf32>
    %44 = arith.mulf %43, %42 : vector<128x2xf32>
    %cst_25 = arith.constant 0.000000e+00 : f32
    %45 = vector.broadcast %cst_25 : f32 to vector<128x110xf32>
    %46 = tpu.concatenate %22, %44, %45 in 1 : vector<128x16xf32>, vector<128x2xf32>, vector<128x110xf32> -> vector<128x128xf32>
    %47 = arith.truncf %46 : vector<128x128xf32> to vector<128x128xbf16>
    %c0_26 = arith.constant 0 : index
    %c0_27 = arith.constant 0 : index
    %48 = vector.load %arg11[%c0_26, %c0_27] : memref<128x128xbf16, #tpu.memory_space<vmem>>, vector<128x128xbf16>
    tpu.vector_store %arg11[%c0_26, %c0_27], %47 {strides = array<i32>} : memref<128x128xbf16, #tpu.memory_space<vmem>>, vector<128x128xbf16>,
    return
  }
  func.func @transform_0(%arg0: i32) -> (i32, i32) {
    %c0_i32 = arith.constant 0 : i32
    %c0_i32_0 = arith.constant 0 : i32
    return %arg0, %c0_i32 : i32, i32
  }
  func.func @transform_1(%arg0: i32) -> (i32, i32) {
    %c0_i32 = arith.constant 0 : i32
    %c0_i32_0 = arith.constant 0 : i32
    return %arg0, %c0_i32 : i32, i32
  }
  func.func @transform_2(%arg0: i32) -> (i32, i32) {
    %c0_i32 = arith.constant 0 : i32
    %c0_i32_0 = arith.constant 0 : i32
    %c0_i32_1 = arith.constant 0 : i32
    return %c0_i32, %c0_i32_0 : i32, i32
  }
  func.func @transform_3(%arg0: i32) -> (i32, i32) {
    %c0_i32 = arith.constant 0 : i32
    %c0_i32_0 = arith.constant 0 : i32
    %c0_i32_1 = arith.constant 0 : i32
    return %c0_i32, %c0_i32_0 : i32, i32
  }
  func.func @transform_4(%arg0: i32) -> (i32, i32) {
    %c0_i32 = arith.constant 0 : i32
    %c0_i32_0 = arith.constant 0 : i32
    %c0_i32_1 = arith.constant 0 : i32
    return %c0_i32, %c0_i32_0 : i32, i32
  }
  func.func @transform_5(%arg0: i32) -> (i32, i32) {
    %c0_i32 = arith.constant 0 : i32
    %c0_i32_0 = arith.constant 0 : i32
    %c0_i32_1 = arith.constant 0 : i32
    return %c0_i32, %c0_i32_0 : i32, i32
  }
  func.func @transform_6(%arg0: i32) -> (i32, i32) {
    %c0_i32 = arith.constant 0 : i32
    %c0_i32_0 = arith.constant 0 : i32
    %c0_i32_1 = arith.constant 0 : i32
    return %c0_i32, %c0_i32_0 : i32, i32
  }
  func.func @transform_7(%arg0: i32) -> (i32, i32) {
    %c0_i32 = arith.constant 0 : i32
    %c0_i32_0 = arith.constant 0 : i32
    %c0_i32_1 = arith.constant 0 : i32
    return %c0_i32, %c0_i32_0 : i32, i32
  }
  func.func @transform_8(%arg0: i32) -> (i32, i32) {
    %c0_i32 = arith.constant 0 : i32
    %c0_i32_0 = arith.constant 0 : i32
    %c0_i32_1 = arith.constant 0 : i32
    return %c0_i32, %c0_i32_0 : i32, i32
  }
  func.func @transform_9(%arg0: i32) -> (i32, i32) {
    %c0_i32 = arith.constant 0 : i32
    %c0_i32_0 = arith.constant 0 : i32
    %c0_i32_1 = arith.constant 0 : i32
    return %c0_i32, %c0_i32_0 : i32, i32
  }
  func.func @transform_10(%arg0: i32) -> (i32, i32) {
    %c0_i32 = arith.constant 0 : i32
    %c0_i32_0 = arith.constant 0 : i32
    return %arg0, %c0_i32 : i32, i32
  }
}

</mosaic_0001>

<llo_original>
// kernel: tpu_custom_call.1
$region0: #{tpu_custom_call.1}
  #allocation0 [shape = 'u32[]', space=smem, size = 0x4, offset = 0x4, fixed_abs, tag = 'smem constant byte address 0x4 - core index']
  #allocation1 [shape = 'u32[144,128]{1,0:T(1,128)}', space=vmem, size = 0x12000, scoped, tag = 'internal scratch']
  #allocation2 [shape = 'f32[1,1]{1,0:T(1,128)S(1)}', space=vmem, size = 0x200, scoped, tag = 'scoped memory for tpu_custom_call.1']
  %s0 = inlined_call_operand.vmem [shape: f32[128,8], index: 0, kind: input, shape index: {}]
  %s1 = inlined_call_operand.vmem [shape: f32[128,2], index: 1, kind: input, shape index: {}]
  %s2 = inlined_call_operand.vmem [shape: f32[8,12], index: 2, kind: input, shape index: {}]
  %s3 = inlined_call_operand.vmem [shape: f32[1,12], index: 3, kind: input, shape index: {}]
  %s4 = inlined_call_operand.vmem [shape: f32[12,16], index: 4, kind: input, shape index: {}]
  %s5 = inlined_call_operand.vmem [shape: f32[1,16], index: 5, kind: input, shape index: {}]
  %s6 = inlined_call_operand.vmem [shape: f32[16,64], index: 6, kind: input, shape index: {}]
  %s7 = inlined_call_operand.vmem [shape: f32[1,64], index: 7, kind: input, shape index: {}]
  %s8 = inlined_call_operand.vmem [shape: f32[1,64], index: 8, kind: input, shape index: {}]
  %s9 = inlined_call_operand.<no memory space> [shape: f32[1,1], index: 9, kind: input, shape index: {}]
  %s10 = inlined_call_operand.hbm [shape: bf16[128,128], index: 10, kind: output, shape index: {}]
  %s11 = sld [smem:[#allocation0]]
  $region50: #{tpu_custom_call.1} parent=0
    _
  %s13 = ssub.s32 1, %s11
  %s14 = scalar_select 0, %s13, %s11
  %v15 = vstv %s9
  %16 = vst [vmem:[#allocation2] sm:$0x1] %v15
  $region1: #{tpu_custom_call.1} parent=0
    #allocation3 [shape = 'u8[32768]{0}', space=vmem, size = 0x8000, scoped, tag = 'output window, operand 0, single buffered']
    #allocation4 [shape = 's32[1]{0}', space=sflag, size = 0x4, scoped, tag = 'scoped memory for tpu_custom_call.1']
    %17 = vsyncpa [#allocation4], 0
    // Predicated region
    $region2: #{tpu_custom_call.1} parent=1 // pred_check
      _
    $region3: #{tpu_custom_call.1} parent=1 // pred_check_branch
      %19 = sbr.rel (0) target = $region5
    $region4: #{tpu_custom_call.1} parent=1 // pred_region
      _
    $region5: #{tpu_custom_call.1} parent=1 // pred_fallthru
      _
    // Predicated region
    $region6: #{tpu_custom_call.1} parent=1 // pred_check
      _
    $region7: #{tpu_custom_call.1} parent=1 // pred_check_branch
      %21 = sbr.rel (0) target = $region9
    $region8: #{tpu_custom_call.1} parent=1 // pred_region
      _
    $region9: #{tpu_custom_call.1} parent=1 // pred_fallthru
      _
    // Predicated region
    $region10: #{tpu_custom_call.1} parent=1 // pred_check
      _
    $region11: #{tpu_custom_call.1} parent=1 // pred_check_branch
      %23 = sbr.rel (0) target = $region13
    $region12: #{tpu_custom_call.1} parent=1 // pred_region
      _
    $region13: #{tpu_custom_call.1} parent=1 // pred_fallthru
      _
    // Predicated region
    $region14: #{tpu_custom_call.1} parent=1 // pred_check
      _
    $region15: #{tpu_custom_call.1} parent=1 // pred_check_branch
      %25 = sbr.rel (0) target = $region17
    $region16: #{tpu_custom_call.1} parent=1 // pred_region
      _
    $region17: #{tpu_custom_call.1} parent=1 // pred_fallthru
      _
    // Predicated region
    $region18: #{tpu_custom_call.1} parent=1 // pred_check
      _
    $region19: #{tpu_custom_call.1} parent=1 // pred_check_branch
      %27 = sbr.rel (0) target = $region21
    $region20: #{tpu_custom_call.1} parent=1 // pred_region
      _
    $region21: #{tpu_custom_call.1} parent=1 // pred_fallthru
      _
    // Predicated region
    $region22: #{tpu_custom_call.1} parent=1 // pred_check
      _
    $region23: #{tpu_custom_call.1} parent=1 // pred_check_branch
      %29 = sbr.rel (0) target = $region25
    $region24: #{tpu_custom_call.1} parent=1 // pred_region
      _
    $region25: #{tpu_custom_call.1} parent=1 // pred_fallthru
      _
    // Predicated region
    $region26: #{tpu_custom_call.1} parent=1 // pred_check
      _
    $region27: #{tpu_custom_call.1} parent=1 // pred_check_branch
      %31 = sbr.rel (0) target = $region29
    $region28: #{tpu_custom_call.1} parent=1 // pred_region
      _
    $region29: #{tpu_custom_call.1} parent=1 // pred_fallthru
      _
    // Predicated region
    $region30: #{tpu_custom_call.1} parent=1 // pred_check
      _
    $region31: #{tpu_custom_call.1} parent=1 // pred_check_branch
      %33 = sbr.rel (0) target = $region33
    $region32: #{tpu_custom_call.1} parent=1 // pred_region
      _
    $region33: #{tpu_custom_call.1} parent=1 // pred_fallthru
      _
    // Predicated region
    $region34: #{tpu_custom_call.1} parent=1 // pred_check
      _
    $region35: #{tpu_custom_call.1} parent=1 // pred_check_branch
      %35 = sbr.rel (0) target = $region37
    $region36: #{tpu_custom_call.1} parent=1 // pred_region
      _
    $region37: #{tpu_custom_call.1} parent=1 // pred_fallthru
      _
    // Predicated region
    $region38: #{tpu_custom_call.1} parent=1 // pred_check
      _
    $region39: #{tpu_custom_call.1} parent=1 // pred_check_branch
      %37 = sbr.rel (0) target = $region41
    $region40: #{tpu_custom_call.1} parent=1 // pred_region
      _
    $region41: #{tpu_custom_call.1} parent=1 // pred_fallthru
      _
    %v38 = vld [vmem:[%s0] sm:$0xff]
    %v39 = vld [vmem:[%s0 + $0x8] sm:$0xff]
    %v40 = vld [vmem:[%s0 + $0x10] sm:$0xff]
    %v41 = vld [vmem:[%s0 + $0x18] sm:$0xff]
    %v42 = vld [vmem:[%s0 + $0x20] sm:$0xff]
    %v43 = vld [vmem:[%s0 + $0x28] sm:$0xff]
    %v44 = vld [vmem:[%s0 + $0x30] sm:$0xff]
    %v45 = vld [vmem:[%s0 + $0x38] sm:$0xff]
    %v46 = vld [vmem:[%s0 + $0x40] sm:$0xff]
    %v47 = vld [vmem:[%s0 + $0x48] sm:$0xff]
    %v48 = vld [vmem:[%s0 + $0x50] sm:$0xff]
    %v49 = vld [vmem:[%s0 + $0x58] sm:$0xff]
    %v50 = vld [vmem:[%s0 + $0x60] sm:$0xff]
    %v51 = vld [vmem:[%s0 + $0x68] sm:$0xff]
    %v52 = vld [vmem:[%s0 + $0x70] sm:$0xff]
    %v53 = vld [vmem:[%s0 + $0x78] sm:$0xff]
    %v54 = vld [vmem:[%s2] sm:$0xff]
    %v55 = vld [vmem:[%s3] sm:$0x1]
    %v57 = vlaneseq
    %v58 = vshrl.u32 %v57, 7
    %v59 = vsub.s32 0, %v58
    %v60 = vrot.slane %v55, %v59
    %vm62 = vcmask 64512
    %v64 = vsel %vm62, %v38, 0
    %v67 = vsel %vm62, %v39, 0
    %v70 = vsel %vm62, %v40, 0
    %v73 = vsel %vm62, %v41, 0
    %v76 = vsel %vm62, %v42, 0
    %v79 = vsel %vm62, %v43, 0
    %v82 = vsel %vm62, %v44, 0
    %v85 = vsel %vm62, %v45, 0
    %v88 = vsel %vm62, %v46, 0
    %v91 = vsel %vm62, %v47, 0
    %v94 = vsel %vm62, %v48, 0
    %v97 = vsel %vm62, %v49, 0
    %v100 = vsel %vm62, %v50, 0
    %v103 = vsel %vm62, %v51, 0
    %v106 = vsel %vm62, %v52, 0
    %v109 = vsel %vm62, %v53, 0
    %111 = vmatprep.subr.mxu0 0.0
    %112 = vmatpush1.msra.mxu0 %v54
    %113 = vmatprep.subr.mxu0 0.0
    %114 = vmatpush1.msra.mxu0 0.0
    %115 = vmatprep.subr.mxu0 0.0
    %116 = vmatpush1.msra.mxu0 0.0
    %117 = vmatprep.subr.mxu0 0.0
    %118 = vmatpush1.msra.mxu0 0.0
    %119 = vmatprep.subr.mxu0 0.0
    %120 = vmatpush1.msra.mxu0 0.0
    %121 = vmatprep.subr.mxu0 0.0
    %122 = vmatpush1.msra.mxu0 0.0
    %123 = vmatprep.subr.mxu0 0.0
    %124 = vmatpush1.msra.mxu0 0.0
    %125 = vmatprep.subr.mxu0 0.0
    %126 = vmatpush1.msra.mxu0 0.0
    %127 = vmatprep.subr.mxu0 0.0
    %128 = vmatpush1.msra.mxu0 0.0
    %129 = vmatprep.subr.mxu0 0.0
    %130 = vmatpush1.msra.mxu0 0.0
    %131 = vmatprep.subr.mxu0 0.0
    %132 = vmatpush1.msra.mxu0 0.0
    %133 = vmatprep.subr.mxu0 0.0
    %134 = vmatpush1.msra.mxu0 0.0
    %135 = vmatprep.subr.mxu0 0.0
    %136 = vmatpush1.msra.mxu0 0.0
    %137 = vmatprep.subr.mxu0 0.0
    %138 = vmatpush1.msra.mxu0 0.0
    %139 = vmatprep.subr.mxu0 0.0
    %140 = vmatpush1.msra.mxu0 0.0
    %141 = vmatprep.subr.mxu0 0.0
    %142 = vmatpush1.msra.mxu0 0.0
    %143 = vmatprep.subr.mxu0 0.0
    %144 = vmatpush1.msra.mxu0 0.0
    %145 = vmatprep.subr.mxu0 0.0
    %146 = vmatpush1.msra.mxu0 0.0
    %147 = vmatprep.subr.mxu0 0.0
    %148 = vmatpush1.msra.mxu0 0.0
    %149 = vmatprep.subr.mxu0 0.0
    %150 = vmatpush1.msra.mxu0 0.0
    %151 = vmatprep.subr.mxu0 0.0
    %152 = vmatpush1.msra.mxu0 0.0
    %153 = vmatprep.subr.mxu0 0.0
    %154 = vmatpush1.msra.mxu0 0.0
    %155 = vmatprep.subr.mxu0 0.0
    %156 = vmatpush1.msra.mxu0 0.0
    %157 = vmatprep.subr.mxu0 0.0
    %158 = vmatpush1.msra.mxu0 0.0
    %159 = vmatprep.subr.mxu0 0.0
    %160 = vmatpush1.msra.mxu0 0.0
    %161 = vmatprep.subr.mxu0 0.0
    %162 = vmatpush1.msra.mxu0 0.0
    %163 = vmatprep.subr.mxu0 0.0
    %164 = vmatpush1.msra.mxu0 0.0
    %165 = vmatprep.subr.mxu0 0.0
    %166 = vmatpush1.msra.mxu0 0.0
    %167 = vmatprep.subr.mxu0 0.0
    %168 = vmatpush1.msra.mxu0 0.0
    %169 = vmatprep.subr.mxu0 0.0
    %170 = vmatpush1.msra.mxu0 0.0
    %171 = vmatprep.subr.mxu0 0.0
    %172 = vmatpush1.msra.mxu0 0.0
    %173 = vmatprep.subr.mxu0 0.0
    %174 = vmatpush1.msra.mxu0 0.0
    %175 = vmatprep.mubr.f32.mxu0 0.0
    %176 = vmatmul.mubr.f32.gmra.mrb[0].mxu0 %v64
    %v177 = vpop.f32.mrb[0].mxu0
    %v178 = vadd.f32 %v60, %v177
    %v179 = vpop.f32.mrb[0].mxu0
    %180 = vmatprep.mubr.f32.mxu0 0.0
    %181 = vmatmul.mubr.f32.gmra.mrb[0].mxu0 %v67
    %v182 = vpop.f32.mrb[0].mxu0
    %v183 = vadd.f32 %v60, %v182
    %v184 = vpop.f32.mrb[0].mxu0
    %185 = vmatprep.mubr.f32.mxu0 0.0
    %186 = vmatmul.mubr.f32.gmra.mrb[0].mxu0 %v70
    %v187 = vpop.f32.mrb[0].mxu0
    %v188 = vadd.f32 %v60, %v187
    %v189 = vpop.f32.mrb[0].mxu0
    %190 = vmatprep.mubr.f32.mxu0 0.0
    %191 = vmatmul.mubr.f32.gmra.mrb[0].mxu0 %v73
    %v192 = vpop.f32.mrb[0].mxu0
    %v193 = vadd.f32 %v60, %v192
    %v194 = vpop.f32.mrb[0].mxu0
    %195 = vmatprep.mubr.f32.mxu0 0.0
    %196 = vmatmul.mubr.f32.gmra.mrb[0].mxu0 %v76
    %v197 = vpop.f32.mrb[0].mxu0
    %v198 = vadd.f32 %v60, %v197
    %v199 = vpop.f32.mrb[0].mxu0
    %200 = vmatprep.mubr.f32.mxu0 0.0
    %201 = vmatmul.mubr.f32.gmra.mrb[0].mxu0 %v79
    %v202 = vpop.f32.mrb[0].mxu0
    %v203 = vadd.f32 %v60, %v202
    %v204 = vpop.f32.mrb[0].mxu0
    %205 = vmatprep.mubr.f32.mxu0 0.0
    %206 = vmatmul.mubr.f32.gmra.mrb[0].mxu0 %v82
    %v207 = vpop.f32.mrb[0].mxu0
    %v208 = vadd.f32 %v60, %v207
    %v209 = vpop.f32.mrb[0].mxu0
    %210 = vmatprep.mubr.f32.mxu0 0.0
    %211 = vmatmul.mubr.f32.gmra.mrb[0].mxu0 %v85
    %v212 = vpop.f32.mrb[0].mxu0
    %v213 = vadd.f32 %v60, %v212
    %v214 = vpop.f32.mrb[0].mxu0
    %215 = vmatprep.mubr.f32.mxu0 0.0
    %216 = vmatmul.mubr.f32.gmra.mrb[0].mxu0 %v88
    %v217 = vpop.f32.mrb[0].mxu0
    %v218 = vadd.f32 %v60, %v217
    %v219 = vpop.f32.mrb[0].mxu0
    %220 = vmatprep.mubr.f32.mxu0 0.0
    %221 = vmatmul.mubr.f32.gmra.mrb[0].mxu0 %v91
    %v222 = vpop.f32.mrb[0].mxu0
    %v223 = vadd.f32 %v60, %v222
    %v224 = vpop.f32.mrb[0].mxu0
    %225 = vmatprep.mubr.f32.mxu0 0.0
    %226 = vmatmul.mubr.f32.gmra.mrb[0].mxu0 %v94
    %v227 = vpop.f32.mrb[0].mxu0
    %v228 = vadd.f32 %v60, %v227
    %v229 = vpop.f32.mrb[0].mxu0
    %230 = vmatprep.mubr.f32.mxu0 0.0
    %231 = vmatmul.mubr.f32.gmra.mrb[0].mxu0 %v97
    %v232 = vpop.f32.mrb[0].mxu0
    %v233 = vadd.f32 %v60, %v232
    %v234 = vpop.f32.mrb[0].mxu0
    %235 = vmatprep.mubr.f32.mxu0 0.0
    %236 = vmatmul.mubr.f32.gmra.mrb[0].mxu0 %v100
    %v237 = vpop.f32.mrb[0].mxu0
    %v238 = vadd.f32 %v60, %v237
    %v239 = vpop.f32.mrb[0].mxu0
    %240 = vmatprep.mubr.f32.mxu0 0.0
    %241 = vmatmul.mubr.f32.gmra.mrb[0].mxu0 %v103
    %v242 = vpop.f32.mrb[0].mxu0
    %v243 = vadd.f32 %v60, %v242
    %v244 = vpop.f32.mrb[0].mxu0
    %245 = vmatprep.mubr.f32.mxu0 0.0
    %246 = vmatmul.mubr.f32.gmra.mrb[0].mxu0 %v106
    %v247 = vpop.f32.mrb[0].mxu0
    %v248 = vadd.f32 %v60, %v247
    %v249 = vpop.f32.mrb[0].mxu0
    %250 = vmatprep.mubr.f32.mxu0 0.0
    %251 = vmatmul.mubr.f32.gmra.mrb[0].mxu0 %v109
    %v252 = vpop.f32.mrb[0].mxu0
    %v253 = vadd.f32 %v60, %v252
    %v254 = vpop.f32.mrb[0].mxu0
    %255 = vdwg.mxu0
    %v256 = vxor.u32 %v178, 2147483648
    %v257 = vxor.u32 %v183, 2147483648
    %v258 = vxor.u32 %v188, 2147483648
    %v259 = vxor.u32 %v193, 2147483648
    %v260 = vxor.u32 %v198, 2147483648
    %v261 = vxor.u32 %v203, 2147483648
    %v262 = vxor.u32 %v208, 2147483648
    %v263 = vxor.u32 %v213, 2147483648
    %v264 = vxor.u32 %v218, 2147483648
    %v265 = vxor.u32 %v223, 2147483648
    %v266 = vxor.u32 %v228, 2147483648
    %v267 = vxor.u32 %v233, 2147483648
    %v268 = vxor.u32 %v238, 2147483648
    %v269 = vxor.u32 %v243, 2147483648
    %v270 = vxor.u32 %v248, 2147483648
    %v271 = vxor.u32 %v253, 2147483648
    %v272 = vmul.f32 %v256, 1.442695
    %v273 = vpow.pop %v272
    %v274 = vmul.f32 %v257, 1.442695
    %v275 = vpow.pop %v274
    %v276 = vmul.f32 %v258, 1.442695
    %v277 = vpow.pop %v276
    %v278 = vmul.f32 %v259, 1.442695
    %v279 = vpow.pop %v278
    %v280 = vmul.f32 %v260, 1.442695
    %v281 = vpow.pop %v280
    %v282 = vmul.f32 %v261, 1.442695
    %v283 = vpow.pop %v282
    %v284 = vmul.f32 %v262, 1.442695
    %v285 = vpow.pop %v284
    %v286 = vmul.f32 %v263, 1.442695
    %v287 = vpow.pop %v286
    %v288 = vmul.f32 %v264, 1.442695
    %v289 = vpow.pop %v288
    %v290 = vmul.f32 %v265, 1.442695
    %v291 = vpow.pop %v290
    %v292 = vmul.f32 %v266, 1.442695
    %v293 = vpow.pop %v292
    %v294 = vmul.f32 %v267, 1.442695
    %v295 = vpow.pop %v294
    %v296 = vmul.f32 %v268, 1.442695
    %v297 = vpow.pop %v296
    %v298 = vmul.f32 %v269, 1.442695
    %v299 = vpow.pop %v298
    %v300 = vmul.f32 %v270, 1.442695
    %v301 = vpow.pop %v300
    %v302 = vmul.f32 %v271, 1.442695
    %v303 = vpow.pop %v302
    %v304 = vadd.f32 %v273, 1.0
    %v305 = vadd.f32 %v275, 1.0
    %v306 = vadd.f32 %v277, 1.0
    %v307 = vadd.f32 %v279, 1.0
    %v308 = vadd.f32 %v281, 1.0
    %v309 = vadd.f32 %v283, 1.0
    %v310 = vadd.f32 %v285, 1.0
    %v311 = vadd.f32 %v287, 1.0
    %v312 = vadd.f32 %v289, 1.0
    %v313 = vadd.f32 %v291, 1.0
    %v314 = vadd.f32 %v293, 1.0
    %v315 = vadd.f32 %v295, 1.0
    %v316 = vadd.f32 %v297, 1.0
    %v317 = vadd.f32 %v299, 1.0
    %v318 = vadd.f32 %v301, 1.0
    %v319 = vadd.f32 %v303, 1.0
    %v320 = vrcp.pop %v304
    %v321 = vmul.f32 1.0, %v320
    %v322 = vrcp.pop %v305
    %v323 = vmul.f32 1.0, %v322
    %v324 = vrcp.pop %v306
    %v325 = vmul.f32 1.0, %v324
    %v326 = vrcp.pop %v307
    %v327 = vmul.f32 1.0, %v326
    %v328 = vrcp.pop %v308
    %v329 = vmul.f32 1.0, %v328
    %v330 = vrcp.pop %v309
    %v331 = vmul.f32 1.0, %v330
    %v332 = vrcp.pop %v310
    %v333 = vmul.f32 1.0, %v332
    %v334 = vrcp.pop %v311
    %v335 = vmul.f32 1.0, %v334
    %v336 = vrcp.pop %v312
    %v337 = vmul.f32 1.0, %v336
    %v338 = vrcp.pop %v313
    %v339 = vmul.f32 1.0, %v338
    %v340 = vrcp.pop %v314
    %v341 = vmul.f32 1.0, %v340
    %v342 = vrcp.pop %v315
    %v343 = vmul.f32 1.0, %v342
    %v344 = vrcp.pop %v316
    %v345 = vmul.f32 1.0, %v344
    %v346 = vrcp.pop %v317
    %v347 = vmul.f32 1.0, %v346
    %v348 = vrcp.pop %v318
    %v349 = vmul.f32 1.0, %v348
    %v350 = vrcp.pop %v319
    %v351 = vmul.f32 1.0, %v350
    %v352 = vmul.f32 %v178, %v321
    %v353 = vmul.f32 %v183, %v323
    %v354 = vmul.f32 %v188, %v325
    %v355 = vmul.f32 %v193, %v327
    %v356 = vmul.f32 %v198, %v329
    %v357 = vmul.f32 %v203, %v331
    %v358 = vmul.f32 %v208, %v333
    %v359 = vmul.f32 %v213, %v335
    %v360 = vmul.f32 %v218, %v337
    %v361 = vmul.f32 %v223, %v339
    %v362 = vmul.f32 %v228, %v341
    %v363 = vmul.f32 %v233, %v343
    %v364 = vmul.f32 %v238, %v345
    %v365 = vmul.f32 %v243, %v347
    %v366 = vmul.f32 %v248, %v349
    %v367 = vmul.f32 %v253, %v351
    %v368 = vld [vmem:[%s4] sm:$0xff]
    %v369 = vld [vmem:[%s4 + $0x8] sm:$0xf]
    %v370 = vld [vmem:[%s5] sm:$0x1]
    %v372 = vlaneseq
    %v373 = vshrl.u32 %v372, 7
    %v374 = vsub.s32 0, %v373
    %v375 = vrot.slane %v370, %v374
    %vm377 = vcmask 97280
    %v379 = vsel %vm377, %v352, 0
    %v382 = vsel %vm377, %v353, 0
    %v385 = vsel %vm377, %v354, 0
    %v388 = vsel %vm377, %v355, 0
    %v391 = vsel %vm377, %v356, 0
    %v394 = vsel %vm377, %v357, 0
    %v397 = vsel %vm377, %v358, 0
    %v400 = vsel %vm377, %v359, 0
    %v403 = vsel %vm377, %v360, 0
    %v406 = vsel %vm377, %v361, 0
    %v409 = vsel %vm377, %v362, 0
    %v412 = vsel %vm377, %v363, 0
    %v415 = vsel %vm377, %v364, 0
    %v418 = vsel %vm377, %v365, 0
    %v421 = vsel %vm377, %v366, 0
    %v424 = vsel %vm377, %v367, 0
    %vm426 = vcmask 1043456
    %v428 = vsel %vm426, %v369, 0
    %430 = vmatprep.subr.mxu0 0.0
    %431 = vmatpush1.msra.mxu0 %v368
    %432 = vmatprep.subr.mxu0 0.0
    %433 = vmatpush1.msra.mxu0 %v428
    %434 = vmatprep.subr.mxu0 0.0
    %435 = vmatpush1.msra.mxu0 0.0
    %436 = vmatprep.subr.mxu0 0.0
    %437 = vmatpush1.msra.mxu0 0.0
    %438 = vmatprep.subr.mxu0 0.0
    %439 = vmatpush1.msra.mxu0 0.0
    %440 = vmatprep.subr.mxu0 0.0
    %441 = vmatpush1.msra.mxu0 0.0
    %442 = vmatprep.subr.mxu0 0.0
    %443 = vmatpush1.msra.mxu0 0.0
    %444 = vmatprep.subr.mxu0 0.0
    %445 = vmatpush1.msra.mxu0 0.0
    %446 = vmatprep.subr.mxu0 0.0
    %447 = vmatpush1.msra.mxu0 0.0
    %448 = vmatprep.subr.mxu0 0.0
    %449 = vmatpush1.msra.mxu0 0.0
    %450 = vmatprep.subr.mxu0 0.0
    %451 = vmatpush1.msra.mxu0 0.0
    %452 = vmatprep.subr.mxu0 0.0
    %453 = vmatpush1.msra.mxu0 0.0
    %454 = vmatprep.subr.mxu0 0.0
    %455 = vmatpush1.msra.mxu0 0.0
    %456 = vmatprep.subr.mxu0 0.0
    %457 = vmatpush1.msra.mxu0 0.0
    %458 = vmatprep.subr.mxu0 0.0
    %459 = vmatpush1.msra.mxu0 0.0
    %460 = vmatprep.subr.mxu0 0.0
    %461 = vmatpush1.msra.mxu0 0.0
    %462 = vmatprep.subr.mxu0 0.0
    %463 = vmatpush1.msra.mxu0 0.0
    %464 = vmatprep.subr.mxu0 0.0
    %465 = vmatpush1.msra.mxu0 0.0
    %466 = vmatprep.subr.mxu0 0.0
    %467 = vmatpush1.msra.mxu0 0.0
    %468 = vmatprep.subr.mxu0 0.0
    %469 = vmatpush1.msra.mxu0 0.0
    %470 = vmatprep.subr.mxu0 0.0
    %471 = vmatpush1.msra.mxu0 0.0
    %472 = vmatprep.subr.mxu0 0.0
    %473 = vmatpush1.msra.mxu0 0.0
    %474 = vmatprep.subr.mxu0 0.0
    %475 = vmatpush1.msra.mxu0 0.0
    %476 = vmatprep.subr.mxu0 0.0
    %477 = vmatpush1.msra.mxu0 0.0
    %478 = vmatprep.subr.mxu0 0.0
    %479 = vmatpush1.msra.mxu0 0.0
    %480 = vmatprep.subr.mxu0 0.0
    %481 = vmatpush1.msra.mxu0 0.0
    %482 = vmatprep.subr.mxu0 0.0
    %483 = vmatpush1.msra.mxu0 0.0
    %484 = vmatprep.subr.mxu0 0.0
    %485 = vmatpush1.msra.mxu0 0.0
    %486 = vmatprep.subr.mxu0 0.0
    %487 = vmatpush1.msra.mxu0 0.0
    %488 = vmatprep.subr.mxu0 0.0
    %489 = vmatpush1.msra.mxu0 0.0
    %490 = vmatprep.subr.mxu0 0.0
    %491 = vmatpush1.msra.mxu0 0.0
    %492 = vmatprep.subr.mxu0 0.0
    %493 = vmatpush1.msra.mxu0 0.0
    %494 = vmatprep.mubr.f32.mxu0 0.0
    %495 = vmatmul.mubr.f32.gmra.mrb[0].mxu0 %v379
    %v496 = vpop.f32.mrb[0].mxu0
    %v497 = vadd.f32 %v375, %v496
    %v498 = vpop.f32.mrb[0].mxu0
    %499 = vmatprep.mubr.f32.mxu0 0.0
    %500 = vmatmul.mubr.f32.gmra.mrb[0].mxu0 %v382
    %v501 = vpop.f32.mrb[0].mxu0
    %v502 = vadd.f32 %v375, %v501
    %v503 = vpop.f32.mrb[0].mxu0
    %504 = vmatprep.mubr.f32.mxu0 0.0
    %505 = vmatmul.mubr.f32.gmra.mrb[0].mxu0 %v385
    %v506 = vpop.f32.mrb[0].mxu0
    %v507 = vadd.f32 %v375, %v506
    %v508 = vpop.f32.mrb[0].mxu0
    %509 = vmatprep.mubr.f32.mxu0 0.0
    %510 = vmatmul.mubr.f32.gmra.mrb[0].mxu0 %v388
    %v511 = vpop.f32.mrb[0].mxu0
    %v512 = vadd.f32 %v375, %v511
    %v513 = vpop.f32.mrb[0].mxu0
    %514 = vmatprep.mubr.f32.mxu0 0.0
    %515 = vmatmul.mubr.f32.gmra.mrb[0].mxu0 %v391
    %v516 = vpop.f32.mrb[0].mxu0
    %v517 = vadd.f32 %v375, %v516
    %v518 = vpop.f32.mrb[0].mxu0
    %519 = vmatprep.mubr.f32.mxu0 0.0
    %520 = vmatmul.mubr.f32.gmra.mrb[0].mxu0 %v394
    %v521 = vpop.f32.mrb[0].mxu0
    %v522 = vadd.f32 %v375, %v521
    %v523 = vpop.f32.mrb[0].mxu0
    %524 = vmatprep.mubr.f32.mxu0 0.0
    %525 = vmatmul.mubr.f32.gmra.mrb[0].mxu0 %v397
    %v526 = vpop.f32.mrb[0].mxu0
    %v527 = vadd.f32 %v375, %v526
    %v528 = vpop.f32.mrb[0].mxu0
    %529 = vmatprep.mubr.f32.mxu0 0.0
    %530 = vmatmul.mubr.f32.gmra.mrb[0].mxu0 %v400
    %v531 = vpop.f32.mrb[0].mxu0
    %v532 = vadd.f32 %v375, %v531
    %v533 = vpop.f32.mrb[0].mxu0
    %534 = vmatprep.mubr.f32.mxu0 0.0
    %535 = vmatmul.mubr.f32.gmra.mrb[0].mxu0 %v403
    %v536 = vpop.f32.mrb[0].mxu0
    %v537 = vadd.f32 %v375, %v536
    %v538 = vpop.f32.mrb[0].mxu0
    %539 = vmatprep.mubr.f32.mxu0 0.0
    %540 = vmatmul.mubr.f32.gmra.mrb[0].mxu0 %v406
    %v541 = vpop.f32.mrb[0].mxu0
    %v542 = vadd.f32 %v375, %v541
    %v543 = vpop.f32.mrb[0].mxu0
    %544 = vmatprep.mubr.f32.mxu0 0.0
    %545 = vmatmul.mubr.f32.gmra.mrb[0].mxu0 %v409
    %v546 = vpop.f32.mrb[0].mxu0
    %v547 = vadd.f32 %v375, %v546
    %v548 = vpop.f32.mrb[0].mxu0
    %549 = vmatprep.mubr.f32.mxu0 0.0
    %550 = vmatmul.mubr.f32.gmra.mrb[0].mxu0 %v412
    %v551 = vpop.f32.mrb[0].mxu0
    %v552 = vadd.f32 %v375, %v551
    %v553 = vpop.f32.mrb[0].mxu0
    %554 = vmatprep.mubr.f32.mxu0 0.0
    %555 = vmatmul.mubr.f32.gmra.mrb[0].mxu0 %v415
    %v556 = vpop.f32.mrb[0].mxu0
    %v557 = vadd.f32 %v375, %v556
    %v558 = vpop.f32.mrb[0].mxu0
    %559 = vmatprep.mubr.f32.mxu0 0.0
    %560 = vmatmul.mubr.f32.gmra.mrb[0].mxu0 %v418
    %v561 = vpop.f32.mrb[0].mxu0
    %v562 = vadd.f32 %v375, %v561
    %v563 = vpop.f32.mrb[0].mxu0
    %564 = vmatprep.mubr.f32.mxu0 0.0
    %565 = vmatmul.mubr.f32.gmra.mrb[0].mxu0 %v421
    %v566 = vpop.f32.mrb[0].mxu0
    %v567 = vadd.f32 %v375, %v566
    %v568 = vpop.f32.mrb[0].mxu0
    %569 = vmatprep.mubr.f32.mxu0 0.0
    %570 = vmatmul.mubr.f32.gmra.mrb[0].mxu0 %v424
    %v571 = vpop.f32.mrb[0].mxu0
    %v572 = vadd.f32 %v375, %v571
    %v573 = vpop.f32.mrb[0].mxu0
    %574 = vdwg.mxu0
    %v575 = vxor.u32 %v497, 2147483648
    %v576 = vxor.u32 %v502, 2147483648
    %v577 = vxor.u32 %v507, 2147483648
    %v578 = vxor.u32 %v512, 2147483648
    %v579 = vxor.u32 %v517, 2147483648
    %v580 = vxor.u32 %v522, 2147483648
    %v581 = vxor.u32 %v527, 2147483648
    %v582 = vxor.u32 %v532, 2147483648
    %v583 = vxor.u32 %v537, 2147483648
    %v584 = vxor.u32 %v542, 2147483648
    %v585 = vxor.u32 %v547, 2147483648
    %v586 = vxor.u32 %v552, 2147483648
    %v587 = vxor.u32 %v557, 2147483648
    %v588 = vxor.u32 %v562, 2147483648
    %v589 = vxor.u32 %v567, 2147483648
    %v590 = vxor.u32 %v572, 2147483648
    %v591 = vmul.f32 %v575, 1.442695
    %v592 = vpow.pop %v591
    %v593 = vmul.f32 %v576, 1.442695
    %v594 = vpow.pop %v593
    %v595 = vmul.f32 %v577, 1.442695
    %v596 = vpow.pop %v595
    %v597 = vmul.f32 %v578, 1.442695
    %v598 = vpow.pop %v597
    %v599 = vmul.f32 %v579, 1.442695
    %v600 = vpow.pop %v599
    %v601 = vmul.f32 %v580, 1.442695
    %v602 = vpow.pop %v601
    %v603 = vmul.f32 %v581, 1.442695
    %v604 = vpow.pop %v603
    %v605 = vmul.f32 %v582, 1.442695
    %v606 = vpow.pop %v605
    %v607 = vmul.f32 %v583, 1.442695
    %v608 = vpow.pop %v607
    %v609 = vmul.f32 %v584, 1.442695
    %v610 = vpow.pop %v609
    %v611 = vmul.f32 %v585, 1.442695
    %v612 = vpow.pop %v611
    %v613 = vmul.f32 %v586, 1.442695
    %v614 = vpow.pop %v613
    %v615 = vmul.f32 %v587, 1.442695
    %v616 = vpow.pop %v615
    %v617 = vmul.f32 %v588, 1.442695
    %v618 = vpow.pop %v617
    %v619 = vmul.f32 %v589, 1.442695
    %v620 = vpow.pop %v619
    %v621 = vmul.f32 %v590, 1.442695
    %v622 = vpow.pop %v621
    %v623 = vadd.f32 %v592, 1.0
    %v624 = vadd.f32 %v594, 1.0
    %v625 = vadd.f32 %v596, 1.0
    %v626 = vadd.f32 %v598, 1.0
    %v627 = vadd.f32 %v600, 1.0
    %v628 = vadd.f32 %v602, 1.0
    %v629 = vadd.f32 %v604, 1.0
    %v630 = vadd.f32 %v606, 1.0
    %v631 = vadd.f32 %v608, 1.0
    %v632 = vadd.f32 %v610, 1.0
    %v633 = vadd.f32 %v612, 1.0
    %v634 = vadd.f32 %v614, 1.0
    %v635 = vadd.f32 %v616, 1.0
    %v636 = vadd.f32 %v618, 1.0
    %v637 = vadd.f32 %v620, 1.0
    %v638 = vadd.f32 %v622, 1.0
    %v639 = vrcp.pop %v623
    %v640 = vmul.f32 1.0, %v639
    %v641 = vrcp.pop %v624
    %v642 = vmul.f32 1.0, %v641
    %v643 = vrcp.pop %v625
    %v644 = vmul.f32 1.0, %v643
    %v645 = vrcp.pop %v626
    %v646 = vmul.f32 1.0, %v645
    %v647 = vrcp.pop %v627
    %v648 = vmul.f32 1.0, %v647
    %v649 = vrcp.pop %v628
    %v650 = vmul.f32 1.0, %v649
    %v651 = vrcp.pop %v629
    %v652 = vmul.f32 1.0, %v651
    %v653 = vrcp.pop %v630
    %v654 = vmul.f32 1.0, %v653
    %v655 = vrcp.pop %v631
    %v656 = vmul.f32 1.0, %v655
    %v657 = vrcp.pop %v632
    %v658 = vmul.f32 1.0, %v657
    %v659 = vrcp.pop %v633
    %v660 = vmul.f32 1.0, %v659
    %v661 = vrcp.pop %v634
    %v662 = vmul.f32 1.0, %v661
    %v663 = vrcp.pop %v635
    %v664 = vmul.f32 1.0, %v663
    %v665 = vrcp.pop %v636
    %v666 = vmul.f32 1.0, %v665
    %v667 = vrcp.pop %v637
    %v668 = vmul.f32 1.0, %v667
    %v669 = vrcp.pop %v638
    %v670 = vmul.f32 1.0, %v669
    %v671 = vmul.f32 %v497, %v640
    %v672 = vmul.f32 %v502, %v642
    %v673 = vmul.f32 %v507, %v644
    %v674 = vmul.f32 %v512, %v646
    %v675 = vmul.f32 %v517, %v648
    %v676 = vmul.f32 %v522, %v650
    %v677 = vmul.f32 %v527, %v652
    %v678 = vmul.f32 %v532, %v654
    %v679 = vmul.f32 %v537, %v656
    %v680 = vmul.f32 %v542, %v658
    %v681 = vmul.f32 %v547, %v660
    %v682 = vmul.f32 %v552, %v662
    %v683 = vmul.f32 %v557, %v664
    %v684 = vmul.f32 %v562, %v666
    %v685 = vmul.f32 %v567, %v668
    %v686 = vmul.f32 %v572, %v670
    %v687 = vld [vmem:[%s6] sm:$0xff]
    %v688 = vld [vmem:[%s6 + $0x8] sm:$0xff]
    %v689 = vld [vmem:[%s7] sm:$0x1]
    %v691 = vlaneseq
    %v692 = vshrl.u32 %v691, 7
    %v693 = vsub.s32 0, %v692
    %v694 = vrot.slane %v689, %v693
    %vm696 = vcmask 130048
    %v698 = vsel %vm696, %v671, 0
    %v701 = vsel %vm696, %v672, 0
    %v704 = vsel %vm696, %v673, 0
    %v707 = vsel %vm696, %v674, 0
    %v710 = vsel %vm696, %v675, 0
    %v713 = vsel %vm696, %v676, 0
    %v716 = vsel %vm696, %v677, 0
    %v719 = vsel %vm696, %v678, 0
    %v722 = vsel %vm696, %v679, 0
    %v725 = vsel %vm696, %v680, 0
    %v728 = vsel %vm696, %v681, 0
    %v731 = vsel %vm696, %v682, 0
    %v734 = vsel %vm696, %v683, 0
    %v737 = vsel %vm696, %v684, 0
    %v740 = vsel %vm696, %v685, 0
    %v743 = vsel %vm696, %v686, 0
    %745 = vmatprep.subr.mxu0 0.0
    %746 = vmatpush1.msra.mxu0 %v687
    %747 = vmatprep.subr.mxu0 0.0
    %748 = vmatpush1.msra.mxu0 %v688
    %749 = vmatprep.subr.mxu0 0.0
    %750 = vmatpush1.msra.mxu0 0.0
    %751 = vmatprep.subr.mxu0 0.0
    %752 = vmatpush1.msra.mxu0 0.0
    %753 = vmatprep.subr.mxu0 0.0
    %754 = vmatpush1.msra.mxu0 0.0
    %755 = vmatprep.subr.mxu0 0.0
    %756 = vmatpush1.msra.mxu0 0.0
    %757 = vmatprep.subr.mxu0 0.0
    %758 = vmatpush1.msra.mxu0 0.0
    %759 = vmatprep.subr.mxu0 0.0
    %760 = vmatpush1.msra.mxu0 0.0
    %761 = vmatprep.subr.mxu0 0.0
    %762 = vmatpush1.msra.mxu0 0.0
    %763 = vmatprep.subr.mxu0 0.0
    %764 = vmatpush1.msra.mxu0 0.0
    %765 = vmatprep.subr.mxu0 0.0
    %766 = vmatpush1.msra.mxu0 0.0
    %767 = vmatprep.subr.mxu0 0.0
    %768 = vmatpush1.msra.mxu0 0.0
    %769 = vmatprep.subr.mxu0 0.0
    %770 = vmatpush1.msra.mxu0 0.0
    %771 = vmatprep.subr.mxu0 0.0
    %772 = vmatpush1.msra.mxu0 0.0
    %773 = vmatprep.subr.mxu0 0.0
    %774 = vmatpush1.msra.mxu0 0.0
    %775 = vmatprep.subr.mxu0 0.0
    %776 = vmatpush1.msra.mxu0 0.0
    %777 = vmatprep.subr.mxu0 0.0
    %778 = vmatpush1.msra.mxu0 0.0
    %779 = vmatprep.subr.mxu0 0.0
    %780 = vmatpush1.msra.mxu0 0.0
    %781 = vmatprep.subr.mxu0 0.0
    %782 = vmatpush1.msra.mxu0 0.0
    %783 = vmatprep.subr.mxu0 0.0
    %784 = vmatpush1.msra.mxu0 0.0
    %785 = vmatprep.subr.mxu0 0.0
    %786 = vmatpush1.msra.mxu0 0.0
    %787 = vmatprep.subr.mxu0 0.0
    %788 = vmatpush1.msra.mxu0 0.0
    %789 = vmatprep.subr.mxu0 0.0
    %790 = vmatpush1.msra.mxu0 0.0
    %791 = vmatprep.subr.mxu0 0.0
    %792 = vmatpush1.msra.mxu0 0.0
    %793 = vmatprep.subr.mxu0 0.0
    %794 = vmatpush1.msra.mxu0 0.0
    %795 = vmatprep.subr.mxu0 0.0
    %796 = vmatpush1.msra.mxu0 0.0
    %797 = vmatprep.subr.mxu0 0.0
    %798 = vmatpush1.msra.mxu0 0.0
    %799 = vmatprep.subr.mxu0 0.0
    %800 = vmatpush1.msra.mxu0 0.0
    %801 = vmatprep.subr.mxu0 0.0
    %802 = vmatpush1.msra.mxu0 0.0
    %803 = vmatprep.subr.mxu0 0.0
    %804 = vmatpush1.msra.mxu0 0.0
    %805 = vmatprep.subr.mxu0 0.0
    %806 = vmatpush1.msra.mxu0 0.0
    %807 = vmatprep.subr.mxu0 0.0
    %808 = vmatpush1.msra.mxu0 0.0
    %809 = vmatprep.mubr.f32.mxu0 0.0
    %810 = vmatmul.mubr.f32.gmra.mrb[0].mxu0 %v698
    %v811 = vpop.f32.mrb[0].mxu0
    %v812 = vadd.f32 %v694, %v811
    %v813 = vpop.f32.mrb[0].mxu0
    %814 = vmatprep.mubr.f32.mxu0 0.0
    %815 = vmatmul.mubr.f32.gmra.mrb[0].mxu0 %v701
    %v816 = vpop.f32.mrb[0].mxu0
    %v817 = vadd.f32 %v694, %v816
    %v818 = vpop.f32.mrb[0].mxu0
    %819 = vmatprep.mubr.f32.mxu0 0.0
    %820 = vmatmul.mubr.f32.gmra.mrb[0].mxu0 %v704
    %v821 = vpop.f32.mrb[0].mxu0
    %v822 = vadd.f32 %v694, %v821
    %v823 = vpop.f32.mrb[0].mxu0
    %824 = vmatprep.mubr.f32.mxu0 0.0
    %825 = vmatmul.mubr.f32.gmra.mrb[0].mxu0 %v707
    %v826 = vpop.f32.mrb[0].mxu0
    %v827 = vadd.f32 %v694, %v826
    %v828 = vpop.f32.mrb[0].mxu0
    %829 = vmatprep.mubr.f32.mxu0 0.0
    %830 = vmatmul.mubr.f32.gmra.mrb[0].mxu0 %v710
    %v831 = vpop.f32.mrb[0].mxu0
    %v832 = vadd.f32 %v694, %v831
    %v833 = vpop.f32.mrb[0].mxu0
    %834 = vmatprep.mubr.f32.mxu0 0.0
    %835 = vmatmul.mubr.f32.gmra.mrb[0].mxu0 %v713
    %v836 = vpop.f32.mrb[0].mxu0
    %v837 = vadd.f32 %v694, %v836
    %v838 = vpop.f32.mrb[0].mxu0
    %839 = vmatprep.mubr.f32.mxu0 0.0
    %840 = vmatmul.mubr.f32.gmra.mrb[0].mxu0 %v716
    %v841 = vpop.f32.mrb[0].mxu0
    %v842 = vadd.f32 %v694, %v841
    %v843 = vpop.f32.mrb[0].mxu0
    %844 = vmatprep.mubr.f32.mxu0 0.0
    %845 = vmatmul.mubr.f32.gmra.mrb[0].mxu0 %v719
    %v846 = vpop.f32.mrb[0].mxu0
    %v847 = vadd.f32 %v694, %v846
    %v848 = vpop.f32.mrb[0].mxu0
    %849 = vmatprep.mubr.f32.mxu0 0.0
    %850 = vmatmul.mubr.f32.gmra.mrb[0].mxu0 %v722
    %v851 = vpop.f32.mrb[0].mxu0
    %v852 = vadd.f32 %v694, %v851
    %v853 = vpop.f32.mrb[0].mxu0
    %854 = vmatprep.mubr.f32.mxu0 0.0
    %855 = vmatmul.mubr.f32.gmra.mrb[0].mxu0 %v725
    %v856 = vpop.f32.mrb[0].mxu0
    %v857 = vadd.f32 %v694, %v856
    %v858 = vpop.f32.mrb[0].mxu0
    %859 = vmatprep.mubr.f32.mxu0 0.0
    %860 = vmatmul.mubr.f32.gmra.mrb[0].mxu0 %v728
    %v861 = vpop.f32.mrb[0].mxu0
    %v862 = vadd.f32 %v694, %v861
    %v863 = vpop.f32.mrb[0].mxu0
    %864 = vmatprep.mubr.f32.mxu0 0.0
    %865 = vmatmul.mubr.f32.gmra.mrb[0].mxu0 %v731
    %v866 = vpop.f32.mrb[0].mxu0
    %v867 = vadd.f32 %v694, %v866
    %v868 = vpop.f32.mrb[0].mxu0
    %869 = vmatprep.mubr.f32.mxu0 0.0
    %870 = vmatmul.mubr.f32.gmra.mrb[0].mxu0 %v734
    %v871 = vpop.f32.mrb[0].mxu0
    %v872 = vadd.f32 %v694, %v871
    %v873 = vpop.f32.mrb[0].mxu0
    %874 = vmatprep.mubr.f32.mxu0 0.0
    %875 = vmatmul.mubr.f32.gmra.mrb[0].mxu0 %v737
    %v876 = vpop.f32.mrb[0].mxu0
    %v877 = vadd.f32 %v694, %v876
    %v878 = vpop.f32.mrb[0].mxu0
    %879 = vmatprep.mubr.f32.mxu0 0.0
    %880 = vmatmul.mubr.f32.gmra.mrb[0].mxu0 %v740
    %v881 = vpop.f32.mrb[0].mxu0
    %v882 = vadd.f32 %v694, %v881
    %v883 = vpop.f32.mrb[0].mxu0
    %884 = vmatprep.mubr.f32.mxu0 0.0
    %885 = vmatmul.mubr.f32.gmra.mrb[0].mxu0 %v743
    %v886 = vpop.f32.mrb[0].mxu0
    %v887 = vadd.f32 %v694, %v886
    %v888 = vpop.f32.mrb[0].mxu0
    %889 = vdwg.mxu0
    %v890 = vxor.u32 %v812, 2147483648
    %v891 = vxor.u32 %v817, 2147483648
    %v892 = vxor.u32 %v822, 2147483648
    %v893 = vxor.u32 %v827, 2147483648
    %v894 = vxor.u32 %v832, 2147483648
    %v895 = vxor.u32 %v837, 2147483648
    %v896 = vxor.u32 %v842, 2147483648
    %v897 = vxor.u32 %v847, 2147483648
    %v898 = vxor.u32 %v852, 2147483648
    %v899 = vxor.u32 %v857, 2147483648
    %v900 = vxor.u32 %v862, 2147483648
    %v901 = vxor.u32 %v867, 2147483648
    %v902 = vxor.u32 %v872, 2147483648
    %v903 = vxor.u32 %v877, 2147483648
    %v904 = vxor.u32 %v882, 2147483648
    %v905 = vxor.u32 %v887, 2147483648
    %v906 = vmul.f32 %v890, 1.442695
    %v907 = vpow.pop %v906
    %v908 = vmul.f32 %v891, 1.442695
    %v909 = vpow.pop %v908
    %v910 = vmul.f32 %v892, 1.442695
    %v911 = vpow.pop %v910
    %v912 = vmul.f32 %v893, 1.442695
    %v913 = vpow.pop %v912
    %v914 = vmul.f32 %v894, 1.442695
    %v915 = vpow.pop %v914
    %v916 = vmul.f32 %v895, 1.442695
    %v917 = vpow.pop %v916
    %v918 = vmul.f32 %v896, 1.442695
    %v919 = vpow.pop %v918
    %v920 = vmul.f32 %v897, 1.442695
    %v921 = vpow.pop %v920
    %v922 = vmul.f32 %v898, 1.442695
    %v923 = vpow.pop %v922
    %v924 = vmul.f32 %v899, 1.442695
    %v925 = vpow.pop %v924
    %v926 = vmul.f32 %v900, 1.442695
    %v927 = vpow.pop %v926
    %v928 = vmul.f32 %v901, 1.442695
    %v929 = vpow.pop %v928
    %v930 = vmul.f32 %v902, 1.442695
    %v931 = vpow.pop %v930
    %v932 = vmul.f32 %v903, 1.442695
    %v933 = vpow.pop %v932
    %v934 = vmul.f32 %v904, 1.442695
    %v935 = vpow.pop %v934
    %v936 = vmul.f32 %v905, 1.442695
    %v937 = vpow.pop %v936
    %v938 = vadd.f32 %v907, 1.0
    %v939 = vadd.f32 %v909, 1.0
    %v940 = vadd.f32 %v911, 1.0
    %v941 = vadd.f32 %v913, 1.0
    %v942 = vadd.f32 %v915, 1.0
    %v943 = vadd.f32 %v917, 1.0
    %v944 = vadd.f32 %v919, 1.0
    %v945 = vadd.f32 %v921, 1.0
    %v946 = vadd.f32 %v923, 1.0
    %v947 = vadd.f32 %v925, 1.0
    %v948 = vadd.f32 %v927, 1.0
    %v949 = vadd.f32 %v929, 1.0
    %v950 = vadd.f32 %v931, 1.0
    %v951 = vadd.f32 %v933, 1.0
    %v952 = vadd.f32 %v935, 1.0
    %v953 = vadd.f32 %v937, 1.0
    %v954 = vrcp.pop %v938
    %v955 = vmul.f32 1.0, %v954
    %v956 = vrcp.pop %v939
    %v957 = vmul.f32 1.0, %v956
    %v958 = vrcp.pop %v940
    %v959 = vmul.f32 1.0, %v958
    %v960 = vrcp.pop %v941
    %v961 = vmul.f32 1.0, %v960
    %v962 = vrcp.pop %v942
    %v963 = vmul.f32 1.0, %v962
    %v964 = vrcp.pop %v943
    %v965 = vmul.f32 1.0, %v964
    %v966 = vrcp.pop %v944
    %v967 = vmul.f32 1.0, %v966
    %v968 = vrcp.pop %v945
    %v969 = vmul.f32 1.0, %v968
    %v970 = vrcp.pop %v946
    %v971 = vmul.f32 1.0, %v970
    %v972 = vrcp.pop %v947
    %v973 = vmul.f32 1.0, %v972
    %v974 = vrcp.pop %v948
    %v975 = vmul.f32 1.0, %v974
    %v976 = vrcp.pop %v949
    %v977 = vmul.f32 1.0, %v976
    %v978 = vrcp.pop %v950
    %v979 = vmul.f32 1.0, %v978
    %v980 = vrcp.pop %v951
    %v981 = vmul.f32 1.0, %v980
    %v982 = vrcp.pop %v952
    %v983 = vmul.f32 1.0, %v982
    %v984 = vrcp.pop %v953
    %v985 = vmul.f32 1.0, %v984
    %v986 = vmul.f32 %v812, %v955
    %v987 = vmul.f32 %v817, %v957
    %v988 = vmul.f32 %v822, %v959
    %v989 = vmul.f32 %v827, %v961
    %v990 = vmul.f32 %v832, %v963
    %v991 = vmul.f32 %v837, %v965
    %v992 = vmul.f32 %v842, %v967
    %v993 = vmul.f32 %v847, %v969
    %v994 = vmul.f32 %v852, %v971
    %v995 = vmul.f32 %v857, %v973
    %v996 = vmul.f32 %v862, %v975
    %v997 = vmul.f32 %v867, %v977
    %v998 = vmul.f32 %v872, %v979
    %v999 = vmul.f32 %v877, %v981
    %v1000 = vmul.f32 %v882, %v983
    %v1001 = vmul.f32 %v887, %v985
    %v1002 = vld [vmem:[%s8] sm:$0x1]
    %v1004 = vlaneseq
    %v1005 = vshrl.u32 %v1004, 7
    %v1006 = vsub.s32 0, %v1005
    %v1007 = vrot.slane %v1002, %v1006
    %v1009 = vmul.f32 %v986, %v1007
    %v1010 = vmul.f32 %v987, %v1007
    %v1011 = vmul.f32 %v988, %v1007
    %v1012 = vmul.f32 %v989, %v1007
    %v1013 = vmul.f32 %v990, %v1007
    %v1014 = vmul.f32 %v991, %v1007
    %v1015 = vmul.f32 %v992, %v1007
    %v1016 = vmul.f32 %v993, %v1007
    %v1017 = vmul.f32 %v994, %v1007
    %v1018 = vmul.f32 %v995, %v1007
    %v1019 = vmul.f32 %v996, %v1007
    %v1020 = vmul.f32 %v997, %v1007
    %v1021 = vmul.f32 %v998, %v1007
    %v1022 = vmul.f32 %v999, %v1007
    %v1023 = vmul.f32 %v1000, %v1007
    %v1024 = vmul.f32 %v1001, %v1007
    %vm1025 = vcmask 523264
    %v1026 = vsel %vm1025, %v1009, 0.0
    %1027 = vadd.xlane.f32.xlu0 %v1026
    %v1028 = vpop.xlane.xlu0 %1027
    %v1029 = vsel %vm1025, %v1010, 0.0
    %1030 = vadd.xlane.f32.xlu0 %v1029
    %v1031 = vpop.xlane.xlu0 %1030
    %v1032 = vsel %vm1025, %v1011, 0.0
    %1033 = vadd.xlane.f32.xlu0 %v1032
    %v1034 = vpop.xlane.xlu0 %1033
    %v1035 = vsel %vm1025, %v1012, 0.0
    %1036 = vadd.xlane.f32.xlu0 %v1035
    %v1037 = vpop.xlane.xlu0 %1036
    %v1038 = vsel %vm1025, %v1013, 0.0
    %1039 = vadd.xlane.f32.xlu0 %v1038
    %v1040 = vpop.xlane.xlu0 %1039
    %v1041 = vsel %vm1025, %v1014, 0.0
    %1042 = vadd.xlane.f32.xlu0 %v1041
    %v1043 = vpop.xlane.xlu0 %1042
    %v1044 = vsel %vm1025, %v1015, 0.0
    %1045 = vadd.xlane.f32.xlu0 %v1044
    %v1046 = vpop.xlane.xlu0 %1045
    %v1047 = vsel %vm1025, %v1016, 0.0
    %1048 = vadd.xlane.f32.xlu0 %v1047
    %v1049 = vpop.xlane.xlu0 %1048
    %v1050 = vsel %vm1025, %v1017, 0.0
    %1051 = vadd.xlane.f32.xlu0 %v1050
    %v1052 = vpop.xlane.xlu0 %1051
    %v1053 = vsel %vm1025, %v1018, 0.0
    %1054 = vadd.xlane.f32.xlu0 %v1053
    %v1055 = vpop.xlane.xlu0 %1054
    %v1056 = vsel %vm1025, %v1019, 0.0
    %1057 = vadd.xlane.f32.xlu0 %v1056
    %v1058 = vpop.xlane.xlu0 %1057
    %v1059 = vsel %vm1025, %v1020, 0.0
    %1060 = vadd.xlane.f32.xlu0 %v1059
    %v1061 = vpop.xlane.xlu0 %1060
    %v1062 = vsel %vm1025, %v1021, 0.0
    %1063 = vadd.xlane.f32.xlu0 %v1062
    %v1064 = vpop.xlane.xlu0 %1063
    %v1065 = vsel %vm1025, %v1022, 0.0
    %1066 = vadd.xlane.f32.xlu0 %v1065
    %v1067 = vpop.xlane.xlu0 %1066
    %v1068 = vsel %vm1025, %v1023, 0.0
    %1069 = vadd.xlane.f32.xlu0 %v1068
    %v1070 = vpop.xlane.xlu0 %1069
    %v1071 = vsel %vm1025, %v1024, 0.0
    %1072 = vadd.xlane.f32.xlu0 %v1071
    %v1073 = vpop.xlane.xlu0 %1072
    %v1074 = vld [vmem:[#allocation2] sm:$0x1]
    %v1076 = vlaneseq
    %v1077 = vshrl.u32 %v1076, 7
    %v1078 = vsub.s32 0, %v1077
    %v1079 = vrot.slane %v1074, %v1078
    %v1081 = vadd.f32 %v1028, %v1079
    %v1082 = vadd.f32 %v1031, %v1079
    %v1083 = vadd.f32 %v1034, %v1079
    %v1084 = vadd.f32 %v1037, %v1079
    %v1085 = vadd.f32 %v1040, %v1079
    %v1086 = vadd.f32 %v1043, %v1079
    %v1087 = vadd.f32 %v1046, %v1079
    %v1088 = vadd.f32 %v1049, %v1079
    %v1089 = vadd.f32 %v1052, %v1079
    %v1090 = vadd.f32 %v1055, %v1079
    %v1091 = vadd.f32 %v1058, %v1079
    %v1092 = vadd.f32 %v1061, %v1079
    %v1093 = vadd.f32 %v1064, %v1079
    %v1094 = vadd.f32 %v1067, %v1079
    %v1095 = vadd.f32 %v1070, %v1079
    %v1096 = vadd.f32 %v1073, %v1079
    %v1097 = vld [vmem:[%s1] sm:$0xff]
    %v1098 = vld [vmem:[%s1 + $0x8] sm:$0xff]
    %v1099 = vld [vmem:[%s1 + $0x10] sm:$0xff]
    %v1100 = vld [vmem:[%s1 + $0x18] sm:$0xff]
    %v1101 = vld [vmem:[%s1 + $0x20] sm:$0xff]
    %v1102 = vld [vmem:[%s1 + $0x28] sm:$0xff]
    %v1103 = vld [vmem:[%s1 + $0x30] sm:$0xff]
    %v1104 = vld [vmem:[%s1 + $0x38] sm:$0xff]
    %v1105 = vld [vmem:[%s1 + $0x40] sm:$0xff]
    %v1106 = vld [vmem:[%s1 + $0x48] sm:$0xff]
    %v1107 = vld [vmem:[%s1 + $0x50] sm:$0xff]
    %v1108 = vld [vmem:[%s1 + $0x58] sm:$0xff]
    %v1109 = vld [vmem:[%s1 + $0x60] sm:$0xff]
    %v1110 = vld [vmem:[%s1 + $0x68] sm:$0xff]
    %v1111 = vld [vmem:[%s1 + $0x70] sm:$0xff]
    %v1112 = vld [vmem:[%s1 + $0x78] sm:$0xff]
    %1114 = vset.pattern.permute.xlu0 0
    %1115 = vperm.xlu0 %1114, %v1081
    %v1116 = vpop.permute.xlu0 %1115
    %1119 = vset.pattern.permute.xlu0 0
    %1120 = vperm.xlu0 %1119, %v1082
    %v1121 = vpop.permute.xlu0 %1120
    %1124 = vset.pattern.permute.xlu0 0
    %1125 = vperm.xlu0 %1124, %v1083
    %v1126 = vpop.permute.xlu0 %1125
    %1129 = vset.pattern.permute.xlu0 0
    %1130 = vperm.xlu0 %1129, %v1084
    %v1131 = vpop.permute.xlu0 %1130
    %1134 = vset.pattern.permute.xlu0 0
    %1135 = vperm.xlu0 %1134, %v1085
    %v1136 = vpop.permute.xlu0 %1135
    %1139 = vset.pattern.permute.xlu0 0
    %1140 = vperm.xlu0 %1139, %v1086
    %v1141 = vpop.permute.xlu0 %1140
    %1144 = vset.pattern.permute.xlu0 0
    %1145 = vperm.xlu0 %1144, %v1087
    %v1146 = vpop.permute.xlu0 %1145
    %1149 = vset.pattern.permute.xlu0 0
    %1150 = vperm.xlu0 %1149, %v1088
    %v1151 = vpop.permute.xlu0 %1150
    %1154 = vset.pattern.permute.xlu0 0
    %1155 = vperm.xlu0 %1154, %v1089
    %v1156 = vpop.permute.xlu0 %1155
    %1159 = vset.pattern.permute.xlu0 0
    %1160 = vperm.xlu0 %1159, %v1090
    %v1161 = vpop.permute.xlu0 %1160
    %1164 = vset.pattern.permute.xlu0 0
    %1165 = vperm.xlu0 %1164, %v1091
    %v1166 = vpop.permute.xlu0 %1165
    %1169 = vset.pattern.permute.xlu0 0
    %1170 = vperm.xlu0 %1169, %v1092
    %v1171 = vpop.permute.xlu0 %1170
    %1174 = vset.pattern.permute.xlu0 0
    %1175 = vperm.xlu0 %1174, %v1093
    %v1176 = vpop.permute.xlu0 %1175
    %1179 = vset.pattern.permute.xlu0 0
    %1180 = vperm.xlu0 %1179, %v1094
    %v1181 = vpop.permute.xlu0 %1180
    %1184 = vset.pattern.permute.xlu0 0
    %1185 = vperm.xlu0 %1184, %v1095
    %v1186 = vpop.permute.xlu0 %1185
    %1189 = vset.pattern.permute.xlu0 0
    %1190 = vperm.xlu0 %1189, %v1096
    %v1191 = vpop.permute.xlu0 %1190
    %v1193 = vmul.f32 %v1116, %v1097
    %v1194 = vmul.f32 %v1121, %v1098
    %v1195 = vmul.f32 %v1126, %v1099
    %v1196 = vmul.f32 %v1131, %v1100
    %v1197 = vmul.f32 %v1136, %v1101
    %v1198 = vmul.f32 %v1141, %v1102
    %v1199 = vmul.f32 %v1146, %v1103
    %v1200 = vmul.f32 %v1151, %v1104
    %v1201 = vmul.f32 %v1156, %v1105
    %v1202 = vmul.f32 %v1161, %v1106
    %v1203 = vmul.f32 %v1166, %v1107
    %v1204 = vmul.f32 %v1171, %v1108
    %v1205 = vmul.f32 %v1176, %v1109
    %v1206 = vmul.f32 %v1181, %v1110
    %v1207 = vmul.f32 %v1186, %v1111
    %v1208 = vmul.f32 %v1191, %v1112
    %1225 = vrot.lane.b32.xlu0 %v1193, 16
    %v1226 = vpop.permute.xlu0 %1225
    %1227 = vrot.lane.b32.xlu0 %v1194, 16
    %v1228 = vpop.permute.xlu0 %1227
    %1229 = vrot.lane.b32.xlu0 %v1195, 16
    %v1230 = vpop.permute.xlu0 %1229
    %1231 = vrot.lane.b32.xlu0 %v1196, 16
    %v1232 = vpop.permute.xlu0 %1231
    %1233 = vrot.lane.b32.xlu0 %v1197, 16
    %v1234 = vpop.permute.xlu0 %1233
    %1235 = vrot.lane.b32.xlu0 %v1198, 16
    %v1236 = vpop.permute.xlu0 %1235
    %1237 = vrot.lane.b32.xlu0 %v1199, 16
    %v1238 = vpop.permute.xlu0 %1237
    %1239 = vrot.lane.b32.xlu0 %v1200, 16
    %v1240 = vpop.permute.xlu0 %1239
    %1241 = vrot.lane.b32.xlu0 %v1201, 16
    %v1242 = vpop.permute.xlu0 %1241
    %1243 = vrot.lane.b32.xlu0 %v1202, 16
    %v1244 = vpop.permute.xlu0 %1243
    %1245 = vrot.lane.b32.xlu0 %v1203, 16
    %v1246 = vpop.permute.xlu0 %1245
    %1247 = vrot.lane.b32.xlu0 %v1204, 16
    %v1248 = vpop.permute.xlu0 %1247
    %1249 = vrot.lane.b32.xlu0 %v1205, 16
    %v1250 = vpop.permute.xlu0 %1249
    %1251 = vrot.lane.b32.xlu0 %v1206, 16
    %v1252 = vpop.permute.xlu0 %1251
    %1253 = vrot.lane.b32.xlu0 %v1207, 16
    %v1254 = vpop.permute.xlu0 %1253
    %1255 = vrot.lane.b32.xlu0 %v1208, 16
    %v1256 = vpop.permute.xlu0 %1255
    %v1273 = vsel %vm696, %v671, %v1226
    %v1274 = vsel %vm696, %v672, %v1228
    %v1275 = vsel %vm696, %v673, %v1230
    %v1276 = vsel %vm696, %v674, %v1232
    %v1277 = vsel %vm696, %v675, %v1234
    %v1278 = vsel %vm696, %v676, %v1236
    %v1279 = vsel %vm696, %v677, %v1238
    %v1280 = vsel %vm696, %v678, %v1240
    %v1281 = vsel %vm696, %v679, %v1242
    %v1282 = vsel %vm696, %v680, %v1244
    %v1283 = vsel %vm696, %v681, %v1246
    %v1284 = vsel %vm696, %v682, %v1248
    %v1285 = vsel %vm696, %v683, %v1250
    %v1286 = vsel %vm696, %v684, %v1252
    %v1287 = vsel %vm696, %v685, %v1254
    %v1288 = vsel %vm696, %v686, %v1256
    %vm1289 = vcmask 146432
    %v1290 = vsel %vm1289, %v1273, 0.0
    %v1291 = vsel %vm1289, %v1274, 0.0
    %v1292 = vsel %vm1289, %v1275, 0.0
    %v1293 = vsel %vm1289, %v1276, 0.0
    %v1294 = vsel %vm1289, %v1277, 0.0
    %v1295 = vsel %vm1289, %v1278, 0.0
    %v1296 = vsel %vm1289, %v1279, 0.0
    %v1297 = vsel %vm1289, %v1280, 0.0
    %v1298 = vsel %vm1289, %v1281, 0.0
    %v1299 = vsel %vm1289, %v1282, 0.0
    %v1300 = vsel %vm1289, %v1283, 0.0
    %v1301 = vsel %vm1289, %v1284, 0.0
    %v1302 = vsel %vm1289, %v1285, 0.0
    %v1303 = vsel %vm1289, %v1286, 0.0
    %v1304 = vsel %vm1289, %v1287, 0.0
    %v1305 = vsel %vm1289, %v1288, 0.0
    %v1306 = vpack.c.bf16 %v1291, %v1290
    %v1307 = vpack.c.bf16 %v1293, %v1292
    %v1308 = vpack.c.bf16 %v1295, %v1294
    %v1309 = vpack.c.bf16 %v1297, %v1296
    %v1310 = vpack.c.bf16 %v1299, %v1298
    %v1311 = vpack.c.bf16 %v1301, %v1300
    %v1312 = vpack.c.bf16 %v1303, %v1302
    %v1313 = vpack.c.bf16 %v1305, %v1304
    %v1322 = vunpack.c.l.b16 %v1306
    %v1323 = vunpack.c.h.b16 %v1306
    %v1324 = vunpack.c.l.b16 %v1307
    %v1325 = vunpack.c.h.b16 %v1307
    %v1326 = vunpack.c.l.b16 %v1308
    %v1327 = vunpack.c.h.b16 %v1308
    %v1328 = vunpack.c.l.b16 %v1309
    %v1329 = vunpack.c.h.b16 %v1309
    %v1330 = vunpack.c.l.b16 %v1310
    %v1331 = vunpack.c.h.b16 %v1310
    %v1332 = vunpack.c.l.b16 %v1311
    %v1333 = vunpack.c.h.b16 %v1311
    %v1334 = vunpack.c.l.b16 %v1312
    %v1335 = vunpack.c.h.b16 %v1312
    %v1336 = vunpack.c.l.b16 %v1313
    %v1337 = vunpack.c.h.b16 %v1313
    %v1338 = vpack.c.b16 %v1322, %v1322
    %v1339 = vpack.c.b16 %v1323, %v1323
    %v1340 = vpack.c.b16 %v1324, %v1324
    %v1341 = vpack.c.b16 %v1325, %v1325
    %v1342 = vpack.c.b16 %v1326, %v1326
    %v1343 = vpack.c.b16 %v1327, %v1327
    %v1344 = vpack.c.b16 %v1328, %v1328
    %v1345 = vpack.c.b16 %v1329, %v1329
    %v1346 = vpack.c.b16 %v1330, %v1330
    %v1347 = vpack.c.b16 %v1331, %v1331
    %v1348 = vpack.c.b16 %v1332, %v1332
    %v1349 = vpack.c.b16 %v1333, %v1333
    %v1350 = vpack.c.b16 %v1334, %v1334
    %v1351 = vpack.c.b16 %v1335, %v1335
    %v1352 = vpack.c.b16 %v1336, %v1336
    %v1353 = vpack.c.b16 %v1337, %v1337
    %1370 = vst [vmem:[#allocation3] sm:$0xf] %v1338
    %1371 = vst [vmem:[#allocation3 + $0x4] sm:$0xf] %v1339
    %1372 = vst [vmem:[#allocation3 + $0x8] sm:$0xf] %v1340
    %1373 = vst [vmem:[#allocation3 + $0xc] sm:$0xf] %v1341
    %1374 = vst [vmem:[#allocation3 + $0x10] sm:$0xf] %v1342
    %1375 = vst [vmem:[#allocation3 + $0x14] sm:$0xf] %v1343
    %1376 = vst [vmem:[#allocation3 + $0x18] sm:$0xf] %v1344
    %1377 = vst [vmem:[#allocation3 + $0x1c] sm:$0xf] %v1345
    %1378 = vst [vmem:[#allocation3 + $0x20] sm:$0xf] %v1346
    %1379 = vst [vmem:[#allocation3 + $0x24] sm:$0xf] %v1347
    %1380 = vst [vmem:[#allocation3 + $0x28] sm:$0xf] %v1348
    %1381 = vst [vmem:[#allocation3 + $0x2c] sm:$0xf] %v1349
    %1382 = vst [vmem:[#allocation3 + $0x30] sm:$0xf] %v1350
    %1383 = vst [vmem:[#allocation3 + $0x34] sm:$0xf] %v1351
    %1384 = vst [vmem:[#allocation3 + $0x38] sm:$0xf] %v1352
    %1385 = vst [vmem:[#allocation3 + $0x3c] sm:$0xf] %v1353
    // Predicated region
    $region42: #{tpu_custom_call.1} parent=1 // pred_check
      _
    $region43: #{tpu_custom_call.1} parent=1 // pred_check_branch
      %1387 = sbr.rel (0) target = $region45
    $region44: #{tpu_custom_call.1} parent=1 // pred_region
      %s1389 = ssub.s32 1024, 1024
      %1390 = vsyncadd [#allocation4], %s1389
      %s1391 = sshll.u32 [#allocation3], 4
      %s1392 = int_to_ptr.vmem [resolvable:$true] %s1391
      %1397 = dma.vmem_to_hbm [thread:$0]  %s1392, 1024, %s10, [#allocation4], 64, 64, 4
    $region45: #{tpu_custom_call.1} parent=1 // pred_fallthru
      _
    // Predicated region
    $region46: #{tpu_custom_call.1} parent=1 // pred_check
      _
    $region47: #{tpu_custom_call.1} parent=1 // pred_check_branch
      %1399 = sbr.rel (0) target = $region49
    $region48: #{tpu_custom_call.1} parent=1 // pred_region
      %1400 = dma.done [#allocation4], 1024
    $region49: #{tpu_custom_call.1} parent=1 // pred_fallthru
      _
    %1401 = vsyncpa [#allocation4], 1

</llo_original>
